<compile_context>
chip_gen: v5e
topology: v5e:2x2
jax: 0.10.0
libtpu: 0.0.40
codegen_flags: <defaults>
</compile_context>

<pallas_src>
import functools

import jax
import jax.numpy as jnp
from jax.experimental import pallas as pl
from jax.experimental.pallas import tpu as pltpu

_LANE = 128
_SUBLANE = 8


def _round_up(x, m):
    return ((x + m - 1) // m) * m


def _leaky_relu(x, slope=0.2):
    # LeakyReLU(0.2): x for x >= 0, 0.2*x for x < 0
    return jnp.maximum(x, slope * x)


def _discriminator_kernel(z_ref,
                          w1_ref, b1_ref,
                          w2_ref, b2_ref,
                          w3_ref, b3_ref,
                          w4_ref, b4_ref,
                          w5_ref, b5_ref,
                          w6_ref, b6_ref,
                          o_ref,
                          *, bf16_epilogue):
    """Whole MLP for one batch tile: 6 bf16 MXU matmuls (f32 accumulate)."""
    h = z_ref[...]  # (TB, ZP) bf16

    hidden = ((w1_ref, b1_ref), (w2_ref, b2_ref), (w3_ref, b3_ref),
              (w4_ref, b4_ref), (w5_ref, b5_ref))
    for w_ref, b_ref in hidden:
        acc = jnp.dot(h, w_ref[...], preferred_element_type=jnp.float32)
        if bf16_epilogue:
            # bf16 bias-add + LeakyReLU (v6e/v7x VPU is bf16-capable); h stays bf16.
            h = _leaky_relu(acc.astype(jnp.bfloat16) + b_ref[...])
        else:
            # f32 epilogue (v5e); cast back to bf16 only for the next MXU matmul.
            h = _leaky_relu(acc + b_ref[...]).astype(jnp.bfloat16)

    out = jnp.dot(h, w6_ref[...], preferred_element_type=jnp.float32) + b6_ref[...]
    o_ref[...] = out.astype(o_ref.dtype)


def _prepare_params(params, bf16_epilogue):
    """PyTorch-layout (W:(out,in) f32, b:(out,) f32) ->
       (W^T zero-padded to (in_pad, out_pad) bf16,
        b zero-padded to (1, out_pad) in the epilogue dtype; final bias stays f32)."""
    prepped = []
    n = len(params)
    for li, (w, b) in enumerate(params):
        out_f, in_f = w.shape
        in_pad = _round_up(in_f, _LANE)
        out_pad = _round_up(out_f, _LANE)
        wt = jnp.zeros((in_pad, out_pad), jnp.float32).at[:in_f, :out_f].set(w.T)
        bp = jnp.zeros((1, out_pad), jnp.float32).at[0, :out_f].set(b)
        if bf16_epilogue and li < n - 1:
            bp = bp.astype(jnp.bfloat16)
        prepped.append((wt.astype(jnp.bfloat16), bp))
    return prepped


def _choose_batch_tiling(B, block_b):
    """Pick (tb, b_pad): tile minimizes padding, 256-aligned when large,
    and gives >=2 grid steps whenever possible (v7x megacore)."""
    b_min = _round_up(B, _SUBLANE)
    n_steps = max(1, -(-b_min // block_b))
    # Guarantee >=2 steps so ("parallel",) can shard across v7x's 2 TensorCores.
    if n_steps == 1 and b_min >= 2 * _SUBLANE:
        n_steps = 2
    per_step = -(-b_min // n_steps)
    align = 256 if per_step >= 256 else _SUBLANE
    tb = _round_up(per_step, align)
    b_pad = tb * n_steps
    return tb, b_pad


def discriminator_forward(z, params, *, block_b=1024, bf16_epilogue=None):
    """z: (B, z_dim) float. params: 6 (W, b) pairs in PyTorch layout (W:(out,in), b:(out,))."""
    B, z_dim = z.shape
    out_dim = params[-1][0].shape[0]

    if bf16_epilogue is None:
        kind = jax.devices()[0].device_kind.lower()
        bf16_epilogue = 'v5' not in kind  # v5e VPU has no bf16; v6e/v7x do.

    prepped = _prepare_params(params, bf16_epilogue)
    zp = prepped[0][0].shape[0]          # padded input feature dim (>=128)
    out_pad = prepped[-1][0].shape[1]    # padded output dim (128)
    hid_pad = prepped[0][0].shape[1]     # padded hidden dim

    tb, b_pad = _choose_batch_tiling(B, block_b)

    # Input tile: bf16, zero-padded in batch and feature dims.
    z_pad = jnp.zeros((b_pad, zp), jnp.bfloat16).at[:B, :z_dim].set(
        z.astype(jnp.bfloat16))

    flat_args = [z_pad]
    for wt, bp in prepped:
        flat_args += [wt, bp]

    # VMEM budget: weights (x2 to cover the double-buffered fallback), activation
    # in/out double buffers, plus headroom for live f32/bf16 tb x hid_pad intermediates.
    weight_bytes = sum(int(wt.size) * wt.dtype.itemsize + int(bp.size) * bp.dtype.itemsize
                       for wt, bp in prepped)
    act_bytes = 2 * tb * zp * 2 + 2 * tb * out_pad * 4
    interm_bytes = 6 * tb * hid_pad * 4
    est = 2 * weight_bytes + act_bytes + interm_bytes + (4 << 20)
    kind = jax.devices()[0].device_kind.lower()
    vmem_cap = (100 << 20) if ('v5' in kind or 'v6' in kind) else (56 << 20)
    vmem_limit = int(min(vmem_cap, max(32 << 20, est)))

    kernel = functools.partial(_discriminator_kernel, bf16_epilogue=bf16_epilogue)

    def _run(single_buffer_weights):
        in_specs = [pl.BlockSpec((tb, zp), lambda i: (i, 0))]
        extra = {}
        if single_buffer_weights:
            # Constant index_map -> never re-DMA'd; one buffer is enough.
            extra = dict(pipeline_mode=pl.Buffered(1))
        for wt, bp in prepped:
            in_specs += [pl.BlockSpec(wt.shape, lambda i: (0, 0), **extra),
                         pl.BlockSpec(bp.shape, lambda i: (0, 0), **extra)]
        return pl.pallas_call(
            kernel,
            out_shape=jax.ShapeDtypeStruct((b_pad, out_pad), jnp.float32),
            grid=(b_pad // tb,),
            in_specs=in_specs,
            out_specs=pl.BlockSpec((tb, out_pad), lambda i: (i, 0)),
            compiler_params=pltpu.CompilerParams(
                dimension_semantics=("parallel",),
                vmem_limit_bytes=vmem_limit),
        )(*flat_args)

    try:
        out = _run(True)
    except Exception:
        # Fallback if this JAX build rejects single-buffered (Buffered(1)) specs.
        out = _run(False)

    # Drop batch/output padding, then mimic PyTorch's .squeeze()
    return jnp.squeeze(out[:B, :out_dim])


def init_params(key, z_dim, hdim, out_dim=2):
    """nn.Linear-style init: W:(out,in), b:(out,), both U(-1/sqrt(fan_in), 1/sqrt(fan_in))."""
    dims = [(z_dim, hdim)] + [(hdim, hdim)] * 4 + [(hdim, out_dim)]
    params = []
    for fan_in, fan_out in dims:
        key, kw, kb = jax.random.split(key, 3)
        bound = 1.0 / (fan_in ** 0.5)
        w = jax.random.uniform(kw, (fan_out, fan_in), jnp.float32, -bound, bound)
        b = jax.random.uniform(kb, (fan_out,), jnp.float32, -bound, bound)
        params.append((w, b))
    return params


def _reference(z, params, bf16_epilogue):
    """Plain-JAX reference mirroring the kernel's bf16 rounding (f32 accumulation in dots)."""
    ep_dt = jnp.bfloat16 if bf16_epilogue else jnp.float32
    h = z.astype(jnp.bfloat16)
    n = len(params)
    out = None
    for i, (w, b) in enumerate(params):
        wt = w.T.astype(jnp.bfloat16)
        acc = jnp.dot(h, wt, preferred_element_type=jnp.float32)
        if i < n - 1:
            hb = acc.astype(ep_dt) + b.astype(ep_dt)
            h = jnp.maximum(hb, 0.2 * hb)
            if not bf16_epilogue:
                h = h.astype(jnp.bfloat16)
        else:
            out = acc + b
    return jnp.squeeze(out)


if __name__ == "__main__":
    # Small shapes consistent with the module: z_dim=5, hdim=32 (scaled down from 1000), batch=8
    z_dim, hdim, batch = 5, 32, 8

    key = jax.random.PRNGKey(0)
    key, kz = jax.random.split(key)
    z = jax.random.normal(kz, (batch, z_dim), jnp.float32)

    params = init_params(key, z_dim, hdim)

    kind = jax.devices()[0].device_kind.lower()
    bf16_epilogue = 'v5' not in kind

    out = discriminator_forward(z, params, bf16_epilogue=bf16_epilogue)
    out = jax.block_until_ready(out)

    ref = _reference(z, params, bf16_epilogue)

    assert out.shape == (batch, 2), out.shape
    assert jnp.allclose(out.astype(jnp.float32), ref.astype(jnp.float32),
                        atol=2e-2, rtol=2e-2), "mismatch vs reference"

    print("KERNEL_OK")
</pallas_src>

<mosaic_0001>
module attributes {stable_mosaic.version = 11 : i64} {
  func.func @_discriminator_kernel(%arg0: i32, %arg1: memref<8x128xbf16, #tpu.memory_space<vmem>>, %arg2: memref<128x128xbf16, #tpu.memory_space<vmem>>, %arg3: memref<1x128xbf16, #tpu.memory_space<vmem>>, %arg4: memref<128x128xbf16, #tpu.memory_space<vmem>>, %arg5: memref<1x128xbf16, #tpu.memory_space<vmem>>, %arg6: memref<128x128xbf16, #tpu.memory_space<vmem>>, %arg7: memref<1x128xbf16, #tpu.memory_space<vmem>>, %arg8: memref<128x128xbf16, #tpu.memory_space<vmem>>, %arg9: memref<1x128xbf16, #tpu.memory_space<vmem>>, %arg10: memref<128x128xbf16, #tpu.memory_space<vmem>>, %arg11: memref<1x128xbf16, #tpu.memory_space<vmem>>, %arg12: memref<128x128xbf16, #tpu.memory_space<vmem>>, %arg13: memref<1x128xf32, #tpu.memory_space<vmem>>, %arg14: memref<8x128xf32, #tpu.memory_space<vmem>>) attributes {dimension_semantics = [#tpu.dimension_semantics<parallel>], iteration_bounds = array<i64: 1>, scalar_prefetch = 0 : i64, scratch_operands = 0 : i64, tpu.core_type = #tpu.core_type<tc>, window_params = [{transform_indices = @transform_0, window_bounds = array<i64: 8, 128>}, {pipeline_mode = #tpu.pipeline_mode<synchronous>, transform_indices = @transform_1, window_bounds = array<i64: 128, 128>}, {pipeline_mode = #tpu.pipeline_mode<synchronous>, transform_indices = @transform_2, window_bounds = array<i64: 1, 128>}, {pipeline_mode = #tpu.pipeline_mode<synchronous>, transform_indices = @transform_3, window_bounds = array<i64: 128, 128>}, {pipeline_mode = #tpu.pipeline_mode<synchronous>, transform_indices = @transform_4, window_bounds = array<i64: 1, 128>}, {pipeline_mode = #tpu.pipeline_mode<synchronous>, transform_indices = @transform_5, window_bounds = array<i64: 128, 128>}, {pipeline_mode = #tpu.pipeline_mode<synchronous>, transform_indices = @transform_6, window_bounds = array<i64: 1, 128>}, {pipeline_mode = #tpu.pipeline_mode<synchronous>, transform_indices = @transform_7, window_bounds = array<i64: 128, 128>}, {pipeline_mode = #tpu.pipeline_mode<synchronous>, transform_indices = @transform_8, window_bounds = array<i64: 1, 128>}, {pipeline_mode = #tpu.pipeline_mode<synchronous>, transform_indices = @transform_9, window_bounds = array<i64: 128, 128>}, {pipeline_mode = #tpu.pipeline_mode<synchronous>, transform_indices = @transform_10, window_bounds = array<i64: 1, 128>}, {pipeline_mode = #tpu.pipeline_mode<synchronous>, transform_indices = @transform_11, window_bounds = array<i64: 128, 128>}, {pipeline_mode = #tpu.pipeline_mode<synchronous>, transform_indices = @transform_12, window_bounds = array<i64: 1, 128>}, {transform_indices = @transform_13, window_bounds = array<i64: 8, 128>}]} {
    %c0 = arith.constant 0 : index
    %c0_0 = arith.constant 0 : index
    %0 = vector.load %arg1[%c0, %c0_0] : memref<8x128xbf16, #tpu.memory_space<vmem>>, vector<8x128xbf16>
    %c0_1 = arith.constant 0 : index
    %c0_2 = arith.constant 0 : index
    %1 = vector.load %arg2[%c0_1, %c0_2] : memref<128x128xbf16, #tpu.memory_space<vmem>>, vector<128x128xbf16>
    %cst = arith.constant dense<0.000000e+00> : vector<8x128xf32>
    %2 = tpu.matmul %0, %1, %cst {dimension_numbers = #tpu.dot_dimension_numbers<[1], [0], [0], [1], [0, 0, 1, 1], [], []>} : vector<8x128xbf16>, vector<128x128xbf16>, vector<8x128xf32> -> vector<8x128xf32>
    %3 = arith.truncf %2 : vector<8x128xf32> to vector<8x128xbf16>
    %c0_3 = arith.constant 0 : index
    %c0_4 = arith.constant 0 : index
    %4 = vector.load %arg3[%c0_3, %c0_4] : memref<1x128xbf16, #tpu.memory_space<vmem>>, vector<1x128xbf16>
    %5 = vector.broadcast %4 : vector<1x128xbf16> to vector<8x128xbf16>
    %6 = arith.addf %3, %5 : vector<8x128xbf16>
    %cst_5 = arith.constant 2.001950e-01 : bf16
    %7 = vector.broadcast %cst_5 : bf16 to vector<8x128xbf16>
    %8 = arith.mulf %7, %6 : vector<8x128xbf16>
    %9 = arith.maximumf %6, %8 : vector<8x128xbf16>
    %c0_6 = arith.constant 0 : index
    %c0_7 = arith.constant 0 : index
    %10 = vector.load %arg4[%c0_6, %c0_7] : memref<128x128xbf16, #tpu.memory_space<vmem>>, vector<128x128xbf16>
    %cst_8 = arith.constant dense<0.000000e+00> : vector<8x128xf32>
    %11 = tpu.matmul %9, %10, %cst_8 {dimension_numbers = #tpu.dot_dimension_numbers<[1], [0], [0], [1], [0, 0, 1, 1], [], []>} : vector<8x128xbf16>, vector<128x128xbf16>, vector<8x128xf32> -> vector<8x128xf32>
    %12 = arith.truncf %11 : vector<8x128xf32> to vector<8x128xbf16>
    %c0_9 = arith.constant 0 : index
    %c0_10 = arith.constant 0 : index
    %13 = vector.load %arg5[%c0_9, %c0_10] : memref<1x128xbf16, #tpu.memory_space<vmem>>, vector<1x128xbf16>
    %14 = vector.broadcast %13 : vector<1x128xbf16> to vector<8x128xbf16>
    %15 = arith.addf %12, %14 : vector<8x128xbf16>
    %cst_11 = arith.constant 2.001950e-01 : bf16
    %16 = vector.broadcast %cst_11 : bf16 to vector<8x128xbf16>
    %17 = arith.mulf %16, %15 : vector<8x128xbf16>
    %18 = arith.maximumf %15, %17 : vector<8x128xbf16>
    %c0_12 = arith.constant 0 : index
    %c0_13 = arith.constant 0 : index
    %19 = vector.load %arg6[%c0_12, %c0_13] : memref<128x128xbf16, #tpu.memory_space<vmem>>, vector<128x128xbf16>
    %cst_14 = arith.constant dense<0.000000e+00> : vector<8x128xf32>
    %20 = tpu.matmul %18, %19, %cst_14 {dimension_numbers = #tpu.dot_dimension_numbers<[1], [0], [0], [1], [0, 0, 1, 1], [], []>} : vector<8x128xbf16>, vector<128x128xbf16>, vector<8x128xf32> -> vector<8x128xf32>
    %21 = arith.truncf %20 : vector<8x128xf32> to vector<8x128xbf16>
    %c0_15 = arith.constant 0 : index
    %c0_16 = arith.constant 0 : index
    %22 = vector.load %arg7[%c0_15, %c0_16] : memref<1x128xbf16, #tpu.memory_space<vmem>>, vector<1x128xbf16>
    %23 = vector.broadcast %22 : vector<1x128xbf16> to vector<8x128xbf16>
    %24 = arith.addf %21, %23 : vector<8x128xbf16>
    %cst_17 = arith.constant 2.001950e-01 : bf16
    %25 = vector.broadcast %cst_17 : bf16 to vector<8x128xbf16>
    %26 = arith.mulf %25, %24 : vector<8x128xbf16>
    %27 = arith.maximumf %24, %26 : vector<8x128xbf16>
    %c0_18 = arith.constant 0 : index
    %c0_19 = arith.constant 0 : index
    %28 = vector.load %arg8[%c0_18, %c0_19] : memref<128x128xbf16, #tpu.memory_space<vmem>>, vector<128x128xbf16>
    %cst_20 = arith.constant dense<0.000000e+00> : vector<8x128xf32>
    %29 = tpu.matmul %27, %28, %cst_20 {dimension_numbers = #tpu.dot_dimension_numbers<[1], [0], [0], [1], [0, 0, 1, 1], [], []>} : vector<8x128xbf16>, vector<128x128xbf16>, vector<8x128xf32> -> vector<8x128xf32>
    %30 = arith.truncf %29 : vector<8x128xf32> to vector<8x128xbf16>
    %c0_21 = arith.constant 0 : index
    %c0_22 = arith.constant 0 : index
    %31 = vector.load %arg9[%c0_21, %c0_22] : memref<1x128xbf16, #tpu.memory_space<vmem>>, vector<1x128xbf16>
    %32 = vector.broadcast %31 : vector<1x128xbf16> to vector<8x128xbf16>
    %33 = arith.addf %30, %32 : vector<8x128xbf16>
    %cst_23 = arith.constant 2.001950e-01 : bf16
    %34 = vector.broadcast %cst_23 : bf16 to vector<8x128xbf16>
    %35 = arith.mulf %34, %33 : vector<8x128xbf16>
    %36 = arith.maximumf %33, %35 : vector<8x128xbf16>
    %c0_24 = arith.constant 0 : index
    %c0_25 = arith.constant 0 : index
    %37 = vector.load %arg10[%c0_24, %c0_25] : memref<128x128xbf16, #tpu.memory_space<vmem>>, vector<128x128xbf16>
    %cst_26 = arith.constant dense<0.000000e+00> : vector<8x128xf32>
    %38 = tpu.matmul %36, %37, %cst_26 {dimension_numbers = #tpu.dot_dimension_numbers<[1], [0], [0], [1], [0, 0, 1, 1], [], []>} : vector<8x128xbf16>, vector<128x128xbf16>, vector<8x128xf32> -> vector<8x128xf32>
    %39 = arith.truncf %38 : vector<8x128xf32> to vector<8x128xbf16>
    %c0_27 = arith.constant 0 : index
    %c0_28 = arith.constant 0 : index
    %40 = vector.load %arg11[%c0_27, %c0_28] : memref<1x128xbf16, #tpu.memory_space<vmem>>, vector<1x128xbf16>
    %41 = vector.broadcast %40 : vector<1x128xbf16> to vector<8x128xbf16>
    %42 = arith.addf %39, %41 : vector<8x128xbf16>
    %cst_29 = arith.constant 2.001950e-01 : bf16
    %43 = vector.broadcast %cst_29 : bf16 to vector<8x128xbf16>
    %44 = arith.mulf %43, %42 : vector<8x128xbf16>
    %45 = arith.maximumf %42, %44 : vector<8x128xbf16>
    %c0_30 = arith.constant 0 : index
    %c0_31 = arith.constant 0 : index
    %46 = vector.load %arg12[%c0_30, %c0_31] : memref<128x128xbf16, #tpu.memory_space<vmem>>, vector<128x128xbf16>
    %cst_32 = arith.constant dense<0.000000e+00> : vector<8x128xf32>
    %47 = tpu.matmul %45, %46, %cst_32 {dimension_numbers = #tpu.dot_dimension_numbers<[1], [0], [0], [1], [0, 0, 1, 1], [], []>} : vector<8x128xbf16>, vector<128x128xbf16>, vector<8x128xf32> -> vector<8x128xf32>
    %c0_33 = arith.constant 0 : index
    %c0_34 = arith.constant 0 : index
    %48 = vector.load %arg13[%c0_33, %c0_34] : memref<1x128xf32, #tpu.memory_space<vmem>>, vector<1x128xf32>
    %49 = vector.broadcast %48 : vector<1x128xf32> to vector<8x128xf32>
    %50 = arith.addf %47, %49 : vector<8x128xf32>
    %c0_35 = arith.constant 0 : index
    %c0_36 = arith.constant 0 : index
    %51 = vector.load %arg14[%c0_35, %c0_36] : memref<8x128xf32, #tpu.memory_space<vmem>>, vector<8x128xf32>
    tpu.vector_store %arg14[%c0_35, %c0_36], %50 {strides = array<i32>} : memref<8x128xf32, #tpu.memory_space<vmem>>, vector<8x128xf32>,
    return
  }
  func.func @transform_0(%arg0: i32) -> (i32, i32) {
    %c0_i32 = arith.constant 0 : i32
    %c0_i32_0 = arith.constant 0 : i32
    return %arg0, %c0_i32 : i32, i32
  }
  func.func @transform_1(%arg0: i32) -> (i32, i32) {
    %c0_i32 = arith.constant 0 : i32
    %c0_i32_0 = arith.constant 0 : i32
    %c0_i32_1 = arith.constant 0 : i32
    return %c0_i32, %c0_i32_0 : i32, i32
  }
  func.func @transform_2(%arg0: i32) -> (i32, i32) {
    %c0_i32 = arith.constant 0 : i32
    %c0_i32_0 = arith.constant 0 : i32
    %c0_i32_1 = arith.constant 0 : i32
    return %c0_i32, %c0_i32_0 : i32, i32
  }
  func.func @transform_3(%arg0: i32) -> (i32, i32) {
    %c0_i32 = arith.constant 0 : i32
    %c0_i32_0 = arith.constant 0 : i32
    %c0_i32_1 = arith.constant 0 : i32
    return %c0_i32, %c0_i32_0 : i32, i32
  }
  func.func @transform_4(%arg0: i32) -> (i32, i32) {
    %c0_i32 = arith.constant 0 : i32
    %c0_i32_0 = arith.constant 0 : i32
    %c0_i32_1 = arith.constant 0 : i32
    return %c0_i32, %c0_i32_0 : i32, i32
  }
  func.func @transform_5(%arg0: i32) -> (i32, i32) {
    %c0_i32 = arith.constant 0 : i32
    %c0_i32_0 = arith.constant 0 : i32
    %c0_i32_1 = arith.constant 0 : i32
    return %c0_i32, %c0_i32_0 : i32, i32
  }
  func.func @transform_6(%arg0: i32) -> (i32, i32) {
    %c0_i32 = arith.constant 0 : i32
    %c0_i32_0 = arith.constant 0 : i32
    %c0_i32_1 = arith.constant 0 : i32
    return %c0_i32, %c0_i32_0 : i32, i32
  }
  func.func @transform_7(%arg0: i32) -> (i32, i32) {
    %c0_i32 = arith.constant 0 : i32
    %c0_i32_0 = arith.constant 0 : i32
    %c0_i32_1 = arith.constant 0 : i32
    return %c0_i32, %c0_i32_0 : i32, i32
  }
  func.func @transform_8(%arg0: i32) -> (i32, i32) {
    %c0_i32 = arith.constant 0 : i32
    %c0_i32_0 = arith.constant 0 : i32
    %c0_i32_1 = arith.constant 0 : i32
    return %c0_i32, %c0_i32_0 : i32, i32
  }
  func.func @transform_9(%arg0: i32) -> (i32, i32) {
    %c0_i32 = arith.constant 0 : i32
    %c0_i32_0 = arith.constant 0 : i32
    %c0_i32_1 = arith.constant 0 : i32
    return %c0_i32, %c0_i32_0 : i32, i32
  }
  func.func @transform_10(%arg0: i32) -> (i32, i32) {
    %c0_i32 = arith.constant 0 : i32
    %c0_i32_0 = arith.constant 0 : i32
    %c0_i32_1 = arith.constant 0 : i32
    return %c0_i32, %c0_i32_0 : i32, i32
  }
  func.func @transform_11(%arg0: i32) -> (i32, i32) {
    %c0_i32 = arith.constant 0 : i32
    %c0_i32_0 = arith.constant 0 : i32
    %c0_i32_1 = arith.constant 0 : i32
    return %c0_i32, %c0_i32_0 : i32, i32
  }
  func.func @transform_12(%arg0: i32) -> (i32, i32) {
    %c0_i32 = arith.constant 0 : i32
    %c0_i32_0 = arith.constant 0 : i32
    %c0_i32_1 = arith.constant 0 : i32
    return %c0_i32, %c0_i32_0 : i32, i32
  }
  func.func @transform_13(%arg0: i32) -> (i32, i32) {
    %c0_i32 = arith.constant 0 : i32
    %c0_i32_0 = arith.constant 0 : i32
    return %arg0, %c0_i32 : i32, i32
  }
}

module attributes {stable_mosaic.version = 11 : i64} {
  func.func @_discriminator_kernel(%arg0: i32, %arg1: memref<8x128xbf16, #tpu.memory_space<vmem>>, %arg2: memref<128x128xbf16, #tpu.memory_space<vmem>>, %arg3: memref<1x128xbf16, #tpu.memory_space<vmem>>, %arg4: memref<128x128xbf16, #tpu.memory_space<vmem>>, %arg5: memref<1x128xbf16, #tpu.memory_space<vmem>>, %arg6: memref<128x128xbf16, #tpu.memory_space<vmem>>, %arg7: memref<1x128xbf16, #tpu.memory_space<vmem>>, %arg8: memref<128x128xbf16, #tpu.memory_space<vmem>>, %arg9: memref<1x128xbf16, #tpu.memory_space<vmem>>, %arg10: memref<128x128xbf16, #tpu.memory_space<vmem>>, %arg11: memref<1x128xbf16, #tpu.memory_space<vmem>>, %arg12: memref<128x128xbf16, #tpu.memory_space<vmem>>, %arg13: memref<1x128xf32, #tpu.memory_space<vmem>>, %arg14: memref<8x128xf32, #tpu.memory_space<vmem>>) attributes {dimension_semantics = [#tpu.dimension_semantics<parallel>], iteration_bounds = array<i64: 1>, scalar_prefetch = 0 : i64, scratch_operands = 0 : i64, tpu.core_type = #tpu.core_type<tc>, window_params = [{transform_indices = @transform_0, window_bounds = array<i64: 8, 128>}, {pipeline_mode = #tpu.pipeline_mode<synchronous>, transform_indices = @transform_1, window_bounds = array<i64: 128, 128>}, {pipeline_mode = #tpu.pipeline_mode<synchronous>, transform_indices = @transform_2, window_bounds = array<i64: 1, 128>}, {pipeline_mode = #tpu.pipeline_mode<synchronous>, transform_indices = @transform_3, window_bounds = array<i64: 128, 128>}, {pipeline_mode = #tpu.pipeline_mode<synchronous>, transform_indices = @transform_4, window_bounds = array<i64: 1, 128>}, {pipeline_mode = #tpu.pipeline_mode<synchronous>, transform_indices = @transform_5, window_bounds = array<i64: 128, 128>}, {pipeline_mode = #tpu.pipeline_mode<synchronous>, transform_indices = @transform_6, window_bounds = array<i64: 1, 128>}, {pipeline_mode = #tpu.pipeline_mode<synchronous>, transform_indices = @transform_7, window_bounds = array<i64: 128, 128>}, {pipeline_mode = #tpu.pipeline_mode<synchronous>, transform_indices = @transform_8, window_bounds = array<i64: 1, 128>}, {pipeline_mode = #tpu.pipeline_mode<synchronous>, transform_indices = @transform_9, window_bounds = array<i64: 128, 128>}, {pipeline_mode = #tpu.pipeline_mode<synchronous>, transform_indices = @transform_10, window_bounds = array<i64: 1, 128>}, {pipeline_mode = #tpu.pipeline_mode<synchronous>, transform_indices = @transform_11, window_bounds = array<i64: 128, 128>}, {pipeline_mode = #tpu.pipeline_mode<synchronous>, transform_indices = @transform_12, window_bounds = array<i64: 1, 128>}, {transform_indices = @transform_13, window_bounds = array<i64: 8, 128>}]} {
    %c0 = arith.constant 0 : index
    %c0_0 = arith.constant 0 : index
    %0 = vector.load %arg1[%c0, %c0_0] : memref<8x128xbf16, #tpu.memory_space<vmem>>, vector<8x128xbf16>
    %c0_1 = arith.constant 0 : index
    %c0_2 = arith.constant 0 : index
    %1 = vector.load %arg2[%c0_1, %c0_2] : memref<128x128xbf16, #tpu.memory_space<vmem>>, vector<128x128xbf16>
    %cst = arith.constant dense<0.000000e+00> : vector<8x128xf32>
    %2 = tpu.matmul %0, %1, %cst {dimension_numbers = #tpu.dot_dimension_numbers<[1], [0], [0], [1], [0, 0, 1, 1], [], []>} : vector<8x128xbf16>, vector<128x128xbf16>, vector<8x128xf32> -> vector<8x128xf32>
    %3 = arith.truncf %2 : vector<8x128xf32> to vector<8x128xbf16>
    %c0_3 = arith.constant 0 : index
    %c0_4 = arith.constant 0 : index
    %4 = vector.load %arg3[%c0_3, %c0_4] : memref<1x128xbf16, #tpu.memory_space<vmem>>, vector<1x128xbf16>
    %5 = vector.broadcast %4 : vector<1x128xbf16> to vector<8x128xbf16>
    %6 = arith.addf %3, %5 : vector<8x128xbf16>
    %cst_5 = arith.constant 2.001950e-01 : bf16
    %7 = vector.broadcast %cst_5 : bf16 to vector<8x128xbf16>
    %8 = arith.mulf %7, %6 : vector<8x128xbf16>
    %9 = arith.maximumf %6, %8 : vector<8x128xbf16>
    %c0_6 = arith.constant 0 : index
    %c0_7 = arith.constant 0 : index
    %10 = vector.load %arg4[%c0_6, %c0_7] : memref<128x128xbf16, #tpu.memory_space<vmem>>, vector<128x128xbf16>
    %cst_8 = arith.constant dense<0.000000e+00> : vector<8x128xf32>
    %11 = tpu.matmul %9, %10, %cst_8 {dimension_numbers = #tpu.dot_dimension_numbers<[1], [0], [0], [1], [0, 0, 1, 1], [], []>} : vector<8x128xbf16>, vector<128x128xbf16>, vector<8x128xf32> -> vector<8x128xf32>
    %12 = arith.truncf %11 : vector<8x128xf32> to vector<8x128xbf16>
    %c0_9 = arith.constant 0 : index
    %c0_10 = arith.constant 0 : index
    %13 = vector.load %arg5[%c0_9, %c0_10] : memref<1x128xbf16, #tpu.memory_space<vmem>>, vector<1x128xbf16>
    %14 = vector.broadcast %13 : vector<1x128xbf16> to vector<8x128xbf16>
    %15 = arith.addf %12, %14 : vector<8x128xbf16>
    %cst_11 = arith.constant 2.001950e-01 : bf16
    %16 = vector.broadcast %cst_11 : bf16 to vector<8x128xbf16>
    %17 = arith.mulf %16, %15 : vector<8x128xbf16>
    %18 = arith.maximumf %15, %17 : vector<8x128xbf16>
    %c0_12 = arith.constant 0 : index
    %c0_13 = arith.constant 0 : index
    %19 = vector.load %arg6[%c0_12, %c0_13] : memref<128x128xbf16, #tpu.memory_space<vmem>>, vector<128x128xbf16>
    %cst_14 = arith.constant dense<0.000000e+00> : vector<8x128xf32>
    %20 = tpu.matmul %18, %19, %cst_14 {dimension_numbers = #tpu.dot_dimension_numbers<[1], [0], [0], [1], [0, 0, 1, 1], [], []>} : vector<8x128xbf16>, vector<128x128xbf16>, vector<8x128xf32> -> vector<8x128xf32>
    %21 = arith.truncf %20 : vector<8x128xf32> to vector<8x128xbf16>
    %c0_15 = arith.constant 0 : index
    %c0_16 = arith.constant 0 : index
    %22 = vector.load %arg7[%c0_15, %c0_16] : memref<1x128xbf16, #tpu.memory_space<vmem>>, vector<1x128xbf16>
    %23 = vector.broadcast %22 : vector<1x128xbf16> to vector<8x128xbf16>
    %24 = arith.addf %21, %23 : vector<8x128xbf16>
    %cst_17 = arith.constant 2.001950e-01 : bf16
    %25 = vector.broadcast %cst_17 : bf16 to vector<8x128xbf16>
    %26 = arith.mulf %25, %24 : vector<8x128xbf16>
    %27 = arith.maximumf %24, %26 : vector<8x128xbf16>
    %c0_18 = arith.constant 0 : index
    %c0_19 = arith.constant 0 : index
    %28 = vector.load %arg8[%c0_18, %c0_19] : memref<128x128xbf16, #tpu.memory_space<vmem>>, vector<128x128xbf16>
    %cst_20 = arith.constant dense<0.000000e+00> : vector<8x128xf32>
    %29 = tpu.matmul %27, %28, %cst_20 {dimension_numbers = #tpu.dot_dimension_numbers<[1], [0], [0], [1], [0, 0, 1, 1], [], []>} : vector<8x128xbf16>, vector<128x128xbf16>, vector<8x128xf32> -> vector<8x128xf32>
    %30 = arith.truncf %29 : vector<8x128xf32> to vector<8x128xbf16>
    %c0_21 = arith.constant 0 : index
    %c0_22 = arith.constant 0 : index
    %31 = vector.load %arg9[%c0_21, %c0_22] : memref<1x128xbf16, #tpu.memory_space<vmem>>, vector<1x128xbf16>
    %32 = vector.broadcast %31 : vector<1x128xbf16> to vector<8x128xbf16>
    %33 = arith.addf %30, %32 : vector<8x128xbf16>
    %cst_23 = arith.constant 2.001950e-01 : bf16
    %34 = vector.broadcast %cst_23 : bf16 to vector<8x128xbf16>
    %35 = arith.mulf %34, %33 : vector<8x128xbf16>
    %36 = arith.maximumf %33, %35 : vector<8x128xbf16>
    %c0_24 = arith.constant 0 : index
    %c0_25 = arith.constant 0 : index
    %37 = vector.load %arg10[%c0_24, %c0_25] : memref<128x128xbf16, #tpu.memory_space<vmem>>, vector<128x128xbf16>
    %cst_26 = arith.constant dense<0.000000e+00> : vector<8x128xf32>
    %38 = tpu.matmul %36, %37, %cst_26 {dimension_numbers = #tpu.dot_dimension_numbers<[1], [0], [0], [1], [0, 0, 1, 1], [], []>} : vector<8x128xbf16>, vector<128x128xbf16>, vector<8x128xf32> -> vector<8x128xf32>
    %39 = arith.truncf %38 : vector<8x128xf32> to vector<8x128xbf16>
    %c0_27 = arith.constant 0 : index
    %c0_28 = arith.constant 0 : index
    %40 = vector.load %arg11[%c0_27, %c0_28] : memref<1x128xbf16, #tpu.memory_space<vmem>>, vector<1x128xbf16>
    %41 = vector.broadcast %40 : vector<1x128xbf16> to vector<8x128xbf16>
    %42 = arith.addf %39, %41 : vector<8x128xbf16>
    %cst_29 = arith.constant 2.001950e-01 : bf16
    %43 = vector.broadcast %cst_29 : bf16 to vector<8x128xbf16>
    %44 = arith.mulf %43, %42 : vector<8x128xbf16>
    %45 = arith.maximumf %42, %44 : vector<8x128xbf16>
    %c0_30 = arith.constant 0 : index
    %c0_31 = arith.constant 0 : index
    %46 = vector.load %arg12[%c0_30, %c0_31] : memref<128x128xbf16, #tpu.memory_space<vmem>>, vector<128x128xbf16>
    %cst_32 = arith.constant dense<0.000000e+00> : vector<8x128xf32>
    %47 = tpu.matmul %45, %46, %cst_32 {dimension_numbers = #tpu.dot_dimension_numbers<[1], [0], [0], [1], [0, 0, 1, 1], [], []>} : vector<8x128xbf16>, vector<128x128xbf16>, vector<8x128xf32> -> vector<8x128xf32>
    %c0_33 = arith.constant 0 : index
    %c0_34 = arith.constant 0 : index
    %48 = vector.load %arg13[%c0_33, %c0_34] : memref<1x128xf32, #tpu.memory_space<vmem>>, vector<1x128xf32>
    %49 = vector.broadcast %48 : vector<1x128xf32> to vector<8x128xf32>
    %50 = arith.addf %47, %49 : vector<8x128xf32>
    %c0_35 = arith.constant 0 : index
    %c0_36 = arith.constant 0 : index
    %51 = vector.load %arg14[%c0_35, %c0_36] : memref<8x128xf32, #tpu.memory_space<vmem>>, vector<8x128xf32>
    tpu.vector_store %arg14[%c0_35, %c0_36], %50 {strides = array<i32>} : memref<8x128xf32, #tpu.memory_space<vmem>>, vector<8x128xf32>,
    return
  }
  func.func @transform_0(%arg0: i32) -> (i32, i32) {
    %c0_i32 = arith.constant 0 : i32
    %c0_i32_0 = arith.constant 0 : i32
    return %arg0, %c0_i32 : i32, i32
  }
  func.func @transform_1(%arg0: i32) -> (i32, i32) {
    %c0_i32 = arith.constant 0 : i32
    %c0_i32_0 = arith.constant 0 : i32
    %c0_i32_1 = arith.constant 0 : i32
    return %c0_i32, %c0_i32_0 : i32, i32
  }
  func.func @transform_2(%arg0: i32) -> (i32, i32) {
    %c0_i32 = arith.constant 0 : i32
    %c0_i32_0 = arith.constant 0 : i32
    %c0_i32_1 = arith.constant 0 : i32
    return %c0_i32, %c0_i32_0 : i32, i32
  }
  func.func @transform_3(%arg0: i32) -> (i32, i32) {
    %c0_i32 = arith.constant 0 : i32
    %c0_i32_0 = arith.constant 0 : i32
    %c0_i32_1 = arith.constant 0 : i32
    return %c0_i32, %c0_i32_0 : i32, i32
  }
  func.func @transform_4(%arg0: i32) -> (i32, i32) {
    %c0_i32 = arith.constant 0 : i32
    %c0_i32_0 = arith.constant 0 : i32
    %c0_i32_1 = arith.constant 0 : i32
    return %c0_i32, %c0_i32_0 : i32, i32
  }
  func.func @transform_5(%arg0: i32) -> (i32, i32) {
    %c0_i32 = arith.constant 0 : i32
    %c0_i32_0 = arith.constant 0 : i32
    %c0_i32_1 = arith.constant 0 : i32
    return %c0_i32, %c0_i32_0 : i32, i32
  }
  func.func @transform_6(%arg0: i32) -> (i32, i32) {
    %c0_i32 = arith.constant 0 : i32
    %c0_i32_0 = arith.constant 0 : i32
    %c0_i32_1 = arith.constant 0 : i32
    return %c0_i32, %c0_i32_0 : i32, i32
  }
  func.func @transform_7(%arg0: i32) -> (i32, i32) {
    %c0_i32 = arith.constant 0 : i32
    %c0_i32_0 = arith.constant 0 : i32
    %c0_i32_1 = arith.constant 0 : i32
    return %c0_i32, %c0_i32_0 : i32, i32
  }
  func.func @transform_8(%arg0: i32) -> (i32, i32) {
    %c0_i32 = arith.constant 0 : i32
    %c0_i32_0 = arith.constant 0 : i32
    %c0_i32_1 = arith.constant 0 : i32
    return %c0_i32, %c0_i32_0 : i32, i32
  }
  func.func @transform_9(%arg0: i32) -> (i32, i32) {
    %c0_i32 = arith.constant 0 : i32
    %c0_i32_0 = arith.constant 0 : i32
    %c0_i32_1 = arith.constant 0 : i32
    return %c0_i32, %c0_i32_0 : i32, i32
  }
  func.func @transform_10(%arg0: i32) -> (i32, i32) {
    %c0_i32 = arith.constant 0 : i32
    %c0_i32_0 = arith.constant 0 : i32
    %c0_i32_1 = arith.constant 0 : i32
    return %c0_i32, %c0_i32_0 : i32, i32
  }
  func.func @transform_11(%arg0: i32) -> (i32, i32) {
    %c0_i32 = arith.constant 0 : i32
    %c0_i32_0 = arith.constant 0 : i32
    %c0_i32_1 = arith.constant 0 : i32
    return %c0_i32, %c0_i32_0 : i32, i32
  }
  func.func @transform_12(%arg0: i32) -> (i32, i32) {
    %c0_i32 = arith.constant 0 : i32
    %c0_i32_0 = arith.constant 0 : i32
    %c0_i32_1 = arith.constant 0 : i32
    return %c0_i32, %c0_i32_0 : i32, i32
  }
  func.func @transform_13(%arg0: i32) -> (i32, i32) {
    %c0_i32 = arith.constant 0 : i32
    %c0_i32_0 = arith.constant 0 : i32
    return %arg0, %c0_i32 : i32, i32
  }
}

</mosaic_0001>

<llo_original>
// kernel: tpu_custom_call.1
$region0: #{tpu_custom_call.1}
  #allocation0 [shape = 'u32[]', space=smem, size = 0x4, offset = 0x4, fixed_abs, tag = 'smem constant byte address 0x4 - core index']
  #allocation1 [shape = 'u32[72,128]{1,0:T(1,128)}', space=vmem, size = 0x9000, scoped, tag = 'internal scratch']
  %s0 = inlined_call_operand.hbm [shape: bf16[8,128], index: 0, kind: input, shape index: {}]
  %s1 = inlined_call_operand.hbm [shape: bf16[128,128], index: 1, kind: input, shape index: {}]
  %s2 = inlined_call_operand.vmem [shape: bf16[1,128], index: 2, kind: input, shape index: {}]
  %s3 = inlined_call_operand.hbm [shape: bf16[128,128], index: 3, kind: input, shape index: {}]
  %s4 = inlined_call_operand.vmem [shape: bf16[1,128], index: 4, kind: input, shape index: {}]
  %s5 = inlined_call_operand.hbm [shape: bf16[128,128], index: 5, kind: input, shape index: {}]
  %s6 = inlined_call_operand.vmem [shape: bf16[1,128], index: 6, kind: input, shape index: {}]
  %s7 = inlined_call_operand.hbm [shape: bf16[128,128], index: 7, kind: input, shape index: {}]
  %s8 = inlined_call_operand.vmem [shape: bf16[1,128], index: 8, kind: input, shape index: {}]
  %s9 = inlined_call_operand.hbm [shape: bf16[128,128], index: 9, kind: input, shape index: {}]
  %s10 = inlined_call_operand.vmem [shape: bf16[1,128], index: 10, kind: input, shape index: {}]
  %s11 = inlined_call_operand.hbm [shape: bf16[128,128], index: 11, kind: input, shape index: {}]
  %s12 = inlined_call_operand.vmem [shape: f32[1,128], index: 12, kind: input, shape index: {}]
  %s13 = inlined_call_operand.hbm [shape: f32[8,128], index: 13, kind: output, shape index: {}]
  %s14 = sld [smem:[#allocation0]]
  $region90: #{tpu_custom_call.1} parent=0
    _
  %s16 = ssub.s32 1, %s14
  %s17 = scalar_select 0, %s16, %s14
  $region1: #{tpu_custom_call.1} parent=0
    #allocation2 [shape = 'u8[2048]{0}', space=vmem, size = 0x800, scoped, tag = 'input window, operand 0, single buffered']
    #allocation3 [shape = 's32[1]{0}', space=sflag, size = 0x4, scoped, tag = 'scoped memory for tpu_custom_call.1']
    #allocation4 [shape = 's32[1]{0}', space=sflag, size = 0x4, scoped, tag = 'scoped memory for tpu_custom_call.1']
    #allocation5 [shape = 'u8[32768]{0}', space=vmem, size = 0x8000, scoped, tag = 'input window, operand 1, single buffered']
    #allocation6 [shape = 's32[1]{0}', space=sflag, size = 0x4, scoped, tag = 'scoped memory for tpu_custom_call.1']
    #allocation7 [shape = 'u8[32768]{0}', space=vmem, size = 0x8000, scoped, tag = 'input window, operand 3, single buffered']
    #allocation8 [shape = 'u8[32768]{0}', space=vmem, size = 0x8000, scoped, tag = 'input window, operand 5, single buffered']
    #allocation9 [shape = 's32[1]{0}', space=sflag, size = 0x4, scoped, tag = 'scoped memory for tpu_custom_call.1']
    #allocation10 [shape = 'u8[32768]{0}', space=vmem, size = 0x8000, scoped, tag = 'input window, operand 7, single buffered']
    #allocation11 [shape = 'u8[32768]{0}', space=vmem, size = 0x8000, scoped, tag = 'input window, operand 9, single buffered']
    #allocation12 [shape = 's32[1]{0}', space=sflag, size = 0x4, scoped, tag = 'scoped memory for tpu_custom_call.1']
    #allocation13 [shape = 'u8[32768]{0}', space=vmem, size = 0x8000, scoped, tag = 'input window, operand 11, single buffered']
    #allocation14 [shape = 'u8[4096]{0}', space=vmem, size = 0x1000, scoped, tag = 'output window, operand 0, single buffered']
    %18 = vsyncpa [#allocation3], 0
    %19 = vsyncpa [#allocation6], 0
    %20 = vsyncpa [#allocation9], 0
    %21 = vsyncpa [#allocation12], 0
    %22 = vsyncpa [#allocation4], 0
    // Predicated region
    $region2: #{tpu_custom_call.1} parent=1 // pred_check
      _
    $region3: #{tpu_custom_call.1} parent=1 // pred_check_branch
      %24 = sbr.rel (0) target = $region5
    $region4: #{tpu_custom_call.1} parent=1 // pred_region
      %26 = vsyncadd [#allocation3], 0
      %s28 = sshll.u32 %s0, 4
      %s29 = int_to_ptr.hbm [resolvable:$true] %s28
      %s30 = sshll.u32 [#allocation2], 4
      %s31 = int_to_ptr.vmem [resolvable:$true] %s30
      %33 = dma.hbm_to_vmem [thread:$0]  %s29, 64, %s31, [#allocation3]
    $region5: #{tpu_custom_call.1} parent=1 // pred_fallthru
      _
    // Predicated region
    $region6: #{tpu_custom_call.1} parent=1 // pred_check
      _
    $region7: #{tpu_custom_call.1} parent=1 // pred_check_branch
      %35 = sbr.rel (0) target = $region9
    $region8: #{tpu_custom_call.1} parent=1 // pred_region
      %37 = vsyncadd [#allocation6], 0
      %s38 = sshll.u32 %s1, 4
      %s39 = int_to_ptr.hbm [resolvable:$true] %s38
      %s40 = sshll.u32 [#allocation5], 4
      %s41 = int_to_ptr.vmem [resolvable:$true] %s40
      %46 = dma.hbm_to_vmem [thread:$0]  %s39, 1024, %s41, [#allocation6], 64, 64, 4
    $region9: #{tpu_custom_call.1} parent=1 // pred_fallthru
      _
    // Predicated region
    $region10: #{tpu_custom_call.1} parent=1 // pred_check
      _
    $region11: #{tpu_custom_call.1} parent=1 // pred_check_branch
      %48 = sbr.rel (0) target = $region13
    $region12: #{tpu_custom_call.1} parent=1 // pred_region
      _
    $region13: #{tpu_custom_call.1} parent=1 // pred_fallthru
      _
    // Predicated region
    $region14: #{tpu_custom_call.1} parent=1 // pred_check
      _
    $region15: #{tpu_custom_call.1} parent=1 // pred_check_branch
      %50 = sbr.rel (0) target = $region17
    $region16: #{tpu_custom_call.1} parent=1 // pred_region
      %52 = vsyncadd [#allocation6], 0
      %s53 = sshll.u32 %s3, 4
      %s54 = int_to_ptr.hbm [resolvable:$true] %s53
      %s55 = sshll.u32 [#allocation7], 4
      %s56 = int_to_ptr.vmem [resolvable:$true] %s55
      %61 = dma.hbm_to_vmem [thread:$0]  %s54, 1024, %s56, [#allocation6], 64, 64, 4
    $region17: #{tpu_custom_call.1} parent=1 // pred_fallthru
      _
    // Predicated region
    $region18: #{tpu_custom_call.1} parent=1 // pred_check
      _
    $region19: #{tpu_custom_call.1} parent=1 // pred_check_branch
      %63 = sbr.rel (0) target = $region21
    $region20: #{tpu_custom_call.1} parent=1 // pred_region
      _
    $region21: #{tpu_custom_call.1} parent=1 // pred_fallthru
      _
    // Predicated region
    $region22: #{tpu_custom_call.1} parent=1 // pred_check
      _
    $region23: #{tpu_custom_call.1} parent=1 // pred_check_branch
      %65 = sbr.rel (0) target = $region25
    $region24: #{tpu_custom_call.1} parent=1 // pred_region
      %67 = vsyncadd [#allocation9], 0
      %s68 = sshll.u32 %s5, 4
      %s69 = int_to_ptr.hbm [resolvable:$true] %s68
      %s70 = sshll.u32 [#allocation8], 4
      %s71 = int_to_ptr.vmem [resolvable:$true] %s70
      %76 = dma.hbm_to_vmem [thread:$0]  %s69, 1024, %s71, [#allocation9], 64, 64, 4
    $region25: #{tpu_custom_call.1} parent=1 // pred_fallthru
      _
    // Predicated region
    $region26: #{tpu_custom_call.1} parent=1 // pred_check
      _
    $region27: #{tpu_custom_call.1} parent=1 // pred_check_branch
      %78 = sbr.rel (0) target = $region29
    $region28: #{tpu_custom_call.1} parent=1 // pred_region
      _
    $region29: #{tpu_custom_call.1} parent=1 // pred_fallthru
      _
    // Predicated region
    $region30: #{tpu_custom_call.1} parent=1 // pred_check
      _
    $region31: #{tpu_custom_call.1} parent=1 // pred_check_branch
      %80 = sbr.rel (0) target = $region33
    $region32: #{tpu_custom_call.1} parent=1 // pred_region
      %82 = vsyncadd [#allocation9], 0
      %s83 = sshll.u32 %s7, 4
      %s84 = int_to_ptr.hbm [resolvable:$true] %s83
      %s85 = sshll.u32 [#allocation10], 4
      %s86 = int_to_ptr.vmem [resolvable:$true] %s85
      %91 = dma.hbm_to_vmem [thread:$0]  %s84, 1024, %s86, [#allocation9], 64, 64, 4
    $region33: #{tpu_custom_call.1} parent=1 // pred_fallthru
      _
    // Predicated region
    $region34: #{tpu_custom_call.1} parent=1 // pred_check
      _
    $region35: #{tpu_custom_call.1} parent=1 // pred_check_branch
      %93 = sbr.rel (0) target = $region37
    $region36: #{tpu_custom_call.1} parent=1 // pred_region
      _
    $region37: #{tpu_custom_call.1} parent=1 // pred_fallthru
      _
    // Predicated region
    $region38: #{tpu_custom_call.1} parent=1 // pred_check
      _
    $region39: #{tpu_custom_call.1} parent=1 // pred_check_branch
      %95 = sbr.rel (0) target = $region41
    $region40: #{tpu_custom_call.1} parent=1 // pred_region
      %97 = vsyncadd [#allocation12], 0
      %s98 = sshll.u32 %s9, 4
      %s99 = int_to_ptr.hbm [resolvable:$true] %s98
      %s100 = sshll.u32 [#allocation11], 4
      %s101 = int_to_ptr.vmem [resolvable:$true] %s100
      %106 = dma.hbm_to_vmem [thread:$0]  %s99, 1024, %s101, [#allocation12], 64, 64, 4
    $region41: #{tpu_custom_call.1} parent=1 // pred_fallthru
      _
    // Predicated region
    $region42: #{tpu_custom_call.1} parent=1 // pred_check
      _
    $region43: #{tpu_custom_call.1} parent=1 // pred_check_branch
      %108 = sbr.rel (0) target = $region45
    $region44: #{tpu_custom_call.1} parent=1 // pred_region
      _
    $region45: #{tpu_custom_call.1} parent=1 // pred_fallthru
      _
    // Predicated region
    $region46: #{tpu_custom_call.1} parent=1 // pred_check
      _
    $region47: #{tpu_custom_call.1} parent=1 // pred_check_branch
      %110 = sbr.rel (0) target = $region49
    $region48: #{tpu_custom_call.1} parent=1 // pred_region
      %112 = vsyncadd [#allocation12], 0
      %s113 = sshll.u32 %s11, 4
      %s114 = int_to_ptr.hbm [resolvable:$true] %s113
      %s115 = sshll.u32 [#allocation13], 4
      %s116 = int_to_ptr.vmem [resolvable:$true] %s115
      %121 = dma.hbm_to_vmem [thread:$0]  %s114, 1024, %s116, [#allocation12], 64, 64, 4
    $region49: #{tpu_custom_call.1} parent=1 // pred_fallthru
      _
    // Predicated region
    $region50: #{tpu_custom_call.1} parent=1 // pred_check
      _
    $region51: #{tpu_custom_call.1} parent=1 // pred_check_branch
      %123 = sbr.rel (0) target = $region53
    $region52: #{tpu_custom_call.1} parent=1 // pred_region
      _
    $region53: #{tpu_custom_call.1} parent=1 // pred_fallthru
      _
    // Predicated region
    $region54: #{tpu_custom_call.1} parent=1 // pred_check
      _
    $region55: #{tpu_custom_call.1} parent=1 // pred_check_branch
      %125 = sbr.rel (0) target = $region57
    $region56: #{tpu_custom_call.1} parent=1 // pred_region
      %127 = dma.done [#allocation3], 64
    $region57: #{tpu_custom_call.1} parent=1 // pred_fallthru
      _
    // Predicated region
    $region58: #{tpu_custom_call.1} parent=1 // pred_check
      _
    $region59: #{tpu_custom_call.1} parent=1 // pred_check_branch
      %129 = sbr.rel (0) target = $region61
    $region60: #{tpu_custom_call.1} parent=1 // pred_region
      %131 = dma.done [#allocation6], 1024
    $region61: #{tpu_custom_call.1} parent=1 // pred_fallthru
      _
    // Predicated region
    $region62: #{tpu_custom_call.1} parent=1 // pred_check
      _
    $region63: #{tpu_custom_call.1} parent=1 // pred_check_branch
      %133 = sbr.rel (0) target = $region65
    $region64: #{tpu_custom_call.1} parent=1 // pred_region
      %135 = dma.done [#allocation6], 1024
    $region65: #{tpu_custom_call.1} parent=1 // pred_fallthru
      _
    // Predicated region
    $region66: #{tpu_custom_call.1} parent=1 // pred_check
      _
    $region67: #{tpu_custom_call.1} parent=1 // pred_check_branch
      %137 = sbr.rel (0) target = $region69
    $region68: #{tpu_custom_call.1} parent=1 // pred_region
      %139 = dma.done [#allocation9], 1024
    $region69: #{tpu_custom_call.1} parent=1 // pred_fallthru
      _
    // Predicated region
    $region70: #{tpu_custom_call.1} parent=1 // pred_check
      _
    $region71: #{tpu_custom_call.1} parent=1 // pred_check_branch
      %141 = sbr.rel (0) target = $region73
    $region72: #{tpu_custom_call.1} parent=1 // pred_region
      %143 = dma.done [#allocation9], 1024
    $region73: #{tpu_custom_call.1} parent=1 // pred_fallthru
      _
    // Predicated region
    $region74: #{tpu_custom_call.1} parent=1 // pred_check
      _
    $region75: #{tpu_custom_call.1} parent=1 // pred_check_branch
      %145 = sbr.rel (0) target = $region77
    $region76: #{tpu_custom_call.1} parent=1 // pred_region
      %147 = dma.done [#allocation12], 1024
    $region77: #{tpu_custom_call.1} parent=1 // pred_fallthru
      _
    // Predicated region
    $region78: #{tpu_custom_call.1} parent=1 // pred_check
      _
    $region79: #{tpu_custom_call.1} parent=1 // pred_check_branch
      %149 = sbr.rel (0) target = $region81
    $region80: #{tpu_custom_call.1} parent=1 // pred_region
      %151 = dma.done [#allocation12], 1024
    $region81: #{tpu_custom_call.1} parent=1 // pred_fallthru
      _
    %v152 = vld [vmem:[#allocation2] sm:$0xf]
    %v153 = vld [vmem:[#allocation5] sm:$0xf]
    %v154 = vld [vmem:[#allocation5 + $0x4] sm:$0xf]
    %v155 = vld [vmem:[#allocation5 + $0x8] sm:$0xf]
    %v156 = vld [vmem:[#allocation5 + $0xc] sm:$0xf]
    %v157 = vld [vmem:[#allocation5 + $0x10] sm:$0xf]
    %v158 = vld [vmem:[#allocation5 + $0x14] sm:$0xf]
    %v159 = vld [vmem:[#allocation5 + $0x18] sm:$0xf]
    %v160 = vld [vmem:[#allocation5 + $0x1c] sm:$0xf]
    %v161 = vld [vmem:[#allocation5 + $0x20] sm:$0xf]
    %v162 = vld [vmem:[#allocation5 + $0x24] sm:$0xf]
    %v163 = vld [vmem:[#allocation5 + $0x28] sm:$0xf]
    %v164 = vld [vmem:[#allocation5 + $0x2c] sm:$0xf]
    %v165 = vld [vmem:[#allocation5 + $0x30] sm:$0xf]
    %v166 = vld [vmem:[#allocation5 + $0x34] sm:$0xf]
    %v167 = vld [vmem:[#allocation5 + $0x38] sm:$0xf]
    %v168 = vld [vmem:[#allocation5 + $0x3c] sm:$0xf]
    %v185 = vunpack.c.l.b16 %v153
    %v186 = vunpack.c.l.b16 %v154
    %v187 = vunpack.c.l.b16 %v155
    %v188 = vunpack.c.l.b16 %v156
    %v189 = vunpack.c.l.b16 %v157
    %v190 = vunpack.c.l.b16 %v158
    %v191 = vunpack.c.l.b16 %v159
    %v192 = vunpack.c.l.b16 %v160
    %v193 = vunpack.c.l.b16 %v161
    %v194 = vunpack.c.l.b16 %v162
    %v195 = vunpack.c.l.b16 %v163
    %v196 = vunpack.c.l.b16 %v164
    %v197 = vunpack.c.l.b16 %v165
    %v198 = vunpack.c.l.b16 %v166
    %v199 = vunpack.c.l.b16 %v167
    %v200 = vunpack.c.l.b16 %v168
    %v201 = vpack.c.b16 %v186, %v185
    %v202 = vpack.c.b16 %v188, %v187
    %v203 = vpack.c.b16 %v190, %v189
    %v204 = vpack.c.b16 %v192, %v191
    %v205 = vpack.c.b16 %v194, %v193
    %v206 = vpack.c.b16 %v196, %v195
    %v207 = vpack.c.b16 %v198, %v197
    %v208 = vpack.c.b16 %v200, %v199
    %217 = vmatpush.bf16.msra.mxu0 %v208
    %218 = vmatpush.bf16.msra.mxu0 %v207
    %219 = vmatpush.bf16.msra.mxu0 %v206
    %220 = vmatpush.bf16.msra.mxu0 %v205
    %221 = vmatpush.bf16.msra.mxu0 %v204
    %222 = vmatpush.bf16.msra.mxu0 %v203
    %223 = vmatpush.bf16.msra.mxu0 %v202
    %224 = vmatpush.bf16.msra.mxu0 %v201
    %225 = vmatmul.bf16.gmra.mxu0 %v152
    %v226 = vpop.f32.mrf.mxu0
    %v227 = vadd.f32 0.0, %v226
    %v228 = vpop.f32.mrf.mxu0
    %229 = vdwg.mxu0
    %v230 = vpack.c.bf16 %v227, %v227
    %v231 = vld [vmem:[%s2] sm:$0x1]
    %v233 = vpack.i.b16 %v231, %v231
    %v235 = vperm.slane %v233, 0
    %v236 = vunpack.c.l.bf16 %v230
    %v237 = vunpack.c.l.bf16 %v235
    %v238 = vadd.f32 %v236, %v237
    %v239 = vpack.c.bf16 %v238, %v238
    %v240 = vunpack.c.l.bf16 %v239
    %v241 = vmul.f32 %v240, 0.20019531
    %v242 = vpack.c.bf16 %v241, %v241
    %v243 = vunpack.c.l.bf16 %v242
    %v244 = vmax.f32 %v240, %v243
    %v245 = vpack.c.bf16 %v244, %v244
    %v246 = vld [vmem:[#allocation7] sm:$0xf]
    %v247 = vld [vmem:[#allocation7 + $0x4] sm:$0xf]
    %v248 = vld [vmem:[#allocation7 + $0x8] sm:$0xf]
    %v249 = vld [vmem:[#allocation7 + $0xc] sm:$0xf]
    %v250 = vld [vmem:[#allocation7 + $0x10] sm:$0xf]
    %v251 = vld [vmem:[#allocation7 + $0x14] sm:$0xf]
    %v252 = vld [vmem:[#allocation7 + $0x18] sm:$0xf]
    %v253 = vld [vmem:[#allocation7 + $0x1c] sm:$0xf]
    %v254 = vld [vmem:[#allocation7 + $0x20] sm:$0xf]
    %v255 = vld [vmem:[#allocation7 + $0x24] sm:$0xf]
    %v256 = vld [vmem:[#allocation7 + $0x28] sm:$0xf]
    %v257 = vld [vmem:[#allocation7 + $0x2c] sm:$0xf]
    %v258 = vld [vmem:[#allocation7 + $0x30] sm:$0xf]
    %v259 = vld [vmem:[#allocation7 + $0x34] sm:$0xf]
    %v260 = vld [vmem:[#allocation7 + $0x38] sm:$0xf]
    %v261 = vld [vmem:[#allocation7 + $0x3c] sm:$0xf]
    %v278 = vunpack.c.l.b16 %v246
    %v279 = vunpack.c.l.b16 %v247
    %v280 = vunpack.c.l.b16 %v248
    %v281 = vunpack.c.l.b16 %v249
    %v282 = vunpack.c.l.b16 %v250
    %v283 = vunpack.c.l.b16 %v251
    %v284 = vunpack.c.l.b16 %v252
    %v285 = vunpack.c.l.b16 %v253
    %v286 = vunpack.c.l.b16 %v254
    %v287 = vunpack.c.l.b16 %v255
    %v288 = vunpack.c.l.b16 %v256
    %v289 = vunpack.c.l.b16 %v257
    %v290 = vunpack.c.l.b16 %v258
    %v291 = vunpack.c.l.b16 %v259
    %v292 = vunpack.c.l.b16 %v260
    %v293 = vunpack.c.l.b16 %v261
    %v294 = vpack.c.b16 %v279, %v278
    %v295 = vpack.c.b16 %v281, %v280
    %v296 = vpack.c.b16 %v283, %v282
    %v297 = vpack.c.b16 %v285, %v284
    %v298 = vpack.c.b16 %v287, %v286
    %v299 = vpack.c.b16 %v289, %v288
    %v300 = vpack.c.b16 %v291, %v290
    %v301 = vpack.c.b16 %v293, %v292
    %310 = vmatpush.bf16.msra.mxu0 %v301
    %311 = vmatpush.bf16.msra.mxu0 %v300
    %312 = vmatpush.bf16.msra.mxu0 %v299
    %313 = vmatpush.bf16.msra.mxu0 %v298
    %314 = vmatpush.bf16.msra.mxu0 %v297
    %315 = vmatpush.bf16.msra.mxu0 %v296
    %316 = vmatpush.bf16.msra.mxu0 %v295
    %317 = vmatpush.bf16.msra.mxu0 %v294
    %318 = vmatmul.bf16.gmra.mxu0 %v245
    %v319 = vpop.f32.mrf.mxu0
    %v320 = vadd.f32 0.0, %v319
    %v321 = vpop.f32.mrf.mxu0
    %322 = vdwg.mxu0
    %v323 = vpack.c.bf16 %v320, %v320
    %v324 = vld [vmem:[%s4] sm:$0x1]
    %v326 = vpack.i.b16 %v324, %v324
    %v328 = vperm.slane %v326, 0
    %v329 = vunpack.c.l.bf16 %v323
    %v330 = vunpack.c.l.bf16 %v328
    %v331 = vadd.f32 %v329, %v330
    %v332 = vpack.c.bf16 %v331, %v331
    %v333 = vunpack.c.l.bf16 %v332
    %v334 = vmul.f32 %v333, 0.20019531
    %v335 = vpack.c.bf16 %v334, %v334
    %v336 = vunpack.c.l.bf16 %v335
    %v337 = vmax.f32 %v333, %v336
    %v338 = vpack.c.bf16 %v337, %v337
    %v339 = vld [vmem:[#allocation8] sm:$0xf]
    %v340 = vld [vmem:[#allocation8 + $0x4] sm:$0xf]
    %v341 = vld [vmem:[#allocation8 + $0x8] sm:$0xf]
    %v342 = vld [vmem:[#allocation8 + $0xc] sm:$0xf]
    %v343 = vld [vmem:[#allocation8 + $0x10] sm:$0xf]
    %v344 = vld [vmem:[#allocation8 + $0x14] sm:$0xf]
    %v345 = vld [vmem:[#allocation8 + $0x18] sm:$0xf]
    %v346 = vld [vmem:[#allocation8 + $0x1c] sm:$0xf]
    %v347 = vld [vmem:[#allocation8 + $0x20] sm:$0xf]
    %v348 = vld [vmem:[#allocation8 + $0x24] sm:$0xf]
    %v349 = vld [vmem:[#allocation8 + $0x28] sm:$0xf]
    %v350 = vld [vmem:[#allocation8 + $0x2c] sm:$0xf]
    %v351 = vld [vmem:[#allocation8 + $0x30] sm:$0xf]
    %v352 = vld [vmem:[#allocation8 + $0x34] sm:$0xf]
    %v353 = vld [vmem:[#allocation8 + $0x38] sm:$0xf]
    %v354 = vld [vmem:[#allocation8 + $0x3c] sm:$0xf]
    %v371 = vunpack.c.l.b16 %v339
    %v372 = vunpack.c.l.b16 %v340
    %v373 = vunpack.c.l.b16 %v341
    %v374 = vunpack.c.l.b16 %v342
    %v375 = vunpack.c.l.b16 %v343
    %v376 = vunpack.c.l.b16 %v344
    %v377 = vunpack.c.l.b16 %v345
    %v378 = vunpack.c.l.b16 %v346
    %v379 = vunpack.c.l.b16 %v347
    %v380 = vunpack.c.l.b16 %v348
    %v381 = vunpack.c.l.b16 %v349
    %v382 = vunpack.c.l.b16 %v350
    %v383 = vunpack.c.l.b16 %v351
    %v384 = vunpack.c.l.b16 %v352
    %v385 = vunpack.c.l.b16 %v353
    %v386 = vunpack.c.l.b16 %v354
    %v387 = vpack.c.b16 %v372, %v371
    %v388 = vpack.c.b16 %v374, %v373
    %v389 = vpack.c.b16 %v376, %v375
    %v390 = vpack.c.b16 %v378, %v377
    %v391 = vpack.c.b16 %v380, %v379
    %v392 = vpack.c.b16 %v382, %v381
    %v393 = vpack.c.b16 %v384, %v383
    %v394 = vpack.c.b16 %v386, %v385
    %403 = vmatpush.bf16.msra.mxu0 %v394
    %404 = vmatpush.bf16.msra.mxu0 %v393
    %405 = vmatpush.bf16.msra.mxu0 %v392
    %406 = vmatpush.bf16.msra.mxu0 %v391
    %407 = vmatpush.bf16.msra.mxu0 %v390
    %408 = vmatpush.bf16.msra.mxu0 %v389
    %409 = vmatpush.bf16.msra.mxu0 %v388
    %410 = vmatpush.bf16.msra.mxu0 %v387
    %411 = vmatmul.bf16.gmra.mxu0 %v338
    %v412 = vpop.f32.mrf.mxu0
    %v413 = vadd.f32 0.0, %v412
    %v414 = vpop.f32.mrf.mxu0
    %415 = vdwg.mxu0
    %v416 = vpack.c.bf16 %v413, %v413
    %v417 = vld [vmem:[%s6] sm:$0x1]
    %v419 = vpack.i.b16 %v417, %v417
    %v421 = vperm.slane %v419, 0
    %v422 = vunpack.c.l.bf16 %v416
    %v423 = vunpack.c.l.bf16 %v421
    %v424 = vadd.f32 %v422, %v423
    %v425 = vpack.c.bf16 %v424, %v424
    %v426 = vunpack.c.l.bf16 %v425
    %v427 = vmul.f32 %v426, 0.20019531
    %v428 = vpack.c.bf16 %v427, %v427
    %v429 = vunpack.c.l.bf16 %v428
    %v430 = vmax.f32 %v426, %v429
    %v431 = vpack.c.bf16 %v430, %v430
    %v432 = vld [vmem:[#allocation10] sm:$0xf]
    %v433 = vld [vmem:[#allocation10 + $0x4] sm:$0xf]
    %v434 = vld [vmem:[#allocation10 + $0x8] sm:$0xf]
    %v435 = vld [vmem:[#allocation10 + $0xc] sm:$0xf]
    %v436 = vld [vmem:[#allocation10 + $0x10] sm:$0xf]
    %v437 = vld [vmem:[#allocation10 + $0x14] sm:$0xf]
    %v438 = vld [vmem:[#allocation10 + $0x18] sm:$0xf]
    %v439 = vld [vmem:[#allocation10 + $0x1c] sm:$0xf]
    %v440 = vld [vmem:[#allocation10 + $0x20] sm:$0xf]
    %v441 = vld [vmem:[#allocation10 + $0x24] sm:$0xf]
    %v442 = vld [vmem:[#allocation10 + $0x28] sm:$0xf]
    %v443 = vld [vmem:[#allocation10 + $0x2c] sm:$0xf]
    %v444 = vld [vmem:[#allocation10 + $0x30] sm:$0xf]
    %v445 = vld [vmem:[#allocation10 + $0x34] sm:$0xf]
    %v446 = vld [vmem:[#allocation10 + $0x38] sm:$0xf]
    %v447 = vld [vmem:[#allocation10 + $0x3c] sm:$0xf]
    %v464 = vunpack.c.l.b16 %v432
    %v465 = vunpack.c.l.b16 %v433
    %v466 = vunpack.c.l.b16 %v434
    %v467 = vunpack.c.l.b16 %v435
    %v468 = vunpack.c.l.b16 %v436
    %v469 = vunpack.c.l.b16 %v437
    %v470 = vunpack.c.l.b16 %v438
    %v471 = vunpack.c.l.b16 %v439
    %v472 = vunpack.c.l.b16 %v440
    %v473 = vunpack.c.l.b16 %v441
    %v474 = vunpack.c.l.b16 %v442
    %v475 = vunpack.c.l.b16 %v443
    %v476 = vunpack.c.l.b16 %v444
    %v477 = vunpack.c.l.b16 %v445
    %v478 = vunpack.c.l.b16 %v446
    %v479 = vunpack.c.l.b16 %v447
    %v480 = vpack.c.b16 %v465, %v464
    %v481 = vpack.c.b16 %v467, %v466
    %v482 = vpack.c.b16 %v469, %v468
    %v483 = vpack.c.b16 %v471, %v470
    %v484 = vpack.c.b16 %v473, %v472
    %v485 = vpack.c.b16 %v475, %v474
    %v486 = vpack.c.b16 %v477, %v476
    %v487 = vpack.c.b16 %v479, %v478
    %496 = vmatpush.bf16.msra.mxu0 %v487
    %497 = vmatpush.bf16.msra.mxu0 %v486
    %498 = vmatpush.bf16.msra.mxu0 %v485
    %499 = vmatpush.bf16.msra.mxu0 %v484
    %500 = vmatpush.bf16.msra.mxu0 %v483
    %501 = vmatpush.bf16.msra.mxu0 %v482
    %502 = vmatpush.bf16.msra.mxu0 %v481
    %503 = vmatpush.bf16.msra.mxu0 %v480
    %504 = vmatmul.bf16.gmra.mxu0 %v431
    %v505 = vpop.f32.mrf.mxu0
    %v506 = vadd.f32 0.0, %v505
    %v507 = vpop.f32.mrf.mxu0
    %508 = vdwg.mxu0
    %v509 = vpack.c.bf16 %v506, %v506
    %v510 = vld [vmem:[%s8] sm:$0x1]
    %v512 = vpack.i.b16 %v510, %v510
    %v514 = vperm.slane %v512, 0
    %v515 = vunpack.c.l.bf16 %v509
    %v516 = vunpack.c.l.bf16 %v514
    %v517 = vadd.f32 %v515, %v516
    %v518 = vpack.c.bf16 %v517, %v517
    %v519 = vunpack.c.l.bf16 %v518
    %v520 = vmul.f32 %v519, 0.20019531
    %v521 = vpack.c.bf16 %v520, %v520
    %v522 = vunpack.c.l.bf16 %v521
    %v523 = vmax.f32 %v519, %v522
    %v524 = vpack.c.bf16 %v523, %v523
    %v525 = vld [vmem:[#allocation11] sm:$0xf]
    %v526 = vld [vmem:[#allocation11 + $0x4] sm:$0xf]
    %v527 = vld [vmem:[#allocation11 + $0x8] sm:$0xf]
    %v528 = vld [vmem:[#allocation11 + $0xc] sm:$0xf]
    %v529 = vld [vmem:[#allocation11 + $0x10] sm:$0xf]
    %v530 = vld [vmem:[#allocation11 + $0x14] sm:$0xf]
    %v531 = vld [vmem:[#allocation11 + $0x18] sm:$0xf]
    %v532 = vld [vmem:[#allocation11 + $0x1c] sm:$0xf]
    %v533 = vld [vmem:[#allocation11 + $0x20] sm:$0xf]
    %v534 = vld [vmem:[#allocation11 + $0x24] sm:$0xf]
    %v535 = vld [vmem:[#allocation11 + $0x28] sm:$0xf]
    %v536 = vld [vmem:[#allocation11 + $0x2c] sm:$0xf]
    %v537 = vld [vmem:[#allocation11 + $0x30] sm:$0xf]
    %v538 = vld [vmem:[#allocation11 + $0x34] sm:$0xf]
    %v539 = vld [vmem:[#allocation11 + $0x38] sm:$0xf]
    %v540 = vld [vmem:[#allocation11 + $0x3c] sm:$0xf]
    %v557 = vunpack.c.l.b16 %v525
    %v558 = vunpack.c.l.b16 %v526
    %v559 = vunpack.c.l.b16 %v527
    %v560 = vunpack.c.l.b16 %v528
    %v561 = vunpack.c.l.b16 %v529
    %v562 = vunpack.c.l.b16 %v530
    %v563 = vunpack.c.l.b16 %v531
    %v564 = vunpack.c.l.b16 %v532
    %v565 = vunpack.c.l.b16 %v533
    %v566 = vunpack.c.l.b16 %v534
    %v567 = vunpack.c.l.b16 %v535
    %v568 = vunpack.c.l.b16 %v536
    %v569 = vunpack.c.l.b16 %v537
    %v570 = vunpack.c.l.b16 %v538
    %v571 = vunpack.c.l.b16 %v539
    %v572 = vunpack.c.l.b16 %v540
    %v573 = vpack.c.b16 %v558, %v557
    %v574 = vpack.c.b16 %v560, %v559
    %v575 = vpack.c.b16 %v562, %v561
    %v576 = vpack.c.b16 %v564, %v563
    %v577 = vpack.c.b16 %v566, %v565
    %v578 = vpack.c.b16 %v568, %v567
    %v579 = vpack.c.b16 %v570, %v569
    %v580 = vpack.c.b16 %v572, %v571
    %589 = vmatpush.bf16.msra.mxu0 %v580
    %590 = vmatpush.bf16.msra.mxu0 %v579
    %591 = vmatpush.bf16.msra.mxu0 %v578
    %592 = vmatpush.bf16.msra.mxu0 %v577
    %593 = vmatpush.bf16.msra.mxu0 %v576
    %594 = vmatpush.bf16.msra.mxu0 %v575
    %595 = vmatpush.bf16.msra.mxu0 %v574
    %596 = vmatpush.bf16.msra.mxu0 %v573
    %597 = vmatmul.bf16.gmra.mxu0 %v524
    %v598 = vpop.f32.mrf.mxu0
    %v599 = vadd.f32 0.0, %v598
    %v600 = vpop.f32.mrf.mxu0
    %601 = vdwg.mxu0
    %v602 = vpack.c.bf16 %v599, %v599
    %v603 = vld [vmem:[%s10] sm:$0x1]
    %v605 = vpack.i.b16 %v603, %v603
    %v607 = vperm.slane %v605, 0
    %v608 = vunpack.c.l.bf16 %v602
    %v609 = vunpack.c.l.bf16 %v607
    %v610 = vadd.f32 %v608, %v609
    %v611 = vpack.c.bf16 %v610, %v610
    %v612 = vunpack.c.l.bf16 %v611
    %v613 = vmul.f32 %v612, 0.20019531
    %v614 = vpack.c.bf16 %v613, %v613
    %v615 = vunpack.c.l.bf16 %v614
    %v616 = vmax.f32 %v612, %v615
    %v617 = vpack.c.bf16 %v616, %v616
    %v618 = vld [vmem:[#allocation13] sm:$0xf]
    %v619 = vld [vmem:[#allocation13 + $0x4] sm:$0xf]
    %v620 = vld [vmem:[#allocation13 + $0x8] sm:$0xf]
    %v621 = vld [vmem:[#allocation13 + $0xc] sm:$0xf]
    %v622 = vld [vmem:[#allocation13 + $0x10] sm:$0xf]
    %v623 = vld [vmem:[#allocation13 + $0x14] sm:$0xf]
    %v624 = vld [vmem:[#allocation13 + $0x18] sm:$0xf]
    %v625 = vld [vmem:[#allocation13 + $0x1c] sm:$0xf]
    %v626 = vld [vmem:[#allocation13 + $0x20] sm:$0xf]
    %v627 = vld [vmem:[#allocation13 + $0x24] sm:$0xf]
    %v628 = vld [vmem:[#allocation13 + $0x28] sm:$0xf]
    %v629 = vld [vmem:[#allocation13 + $0x2c] sm:$0xf]
    %v630 = vld [vmem:[#allocation13 + $0x30] sm:$0xf]
    %v631 = vld [vmem:[#allocation13 + $0x34] sm:$0xf]
    %v632 = vld [vmem:[#allocation13 + $0x38] sm:$0xf]
    %v633 = vld [vmem:[#allocation13 + $0x3c] sm:$0xf]
    %v634 = vld [vmem:[%s12] sm:$0x1]
    %v636 = vperm.slane %v634, 0
    %v654 = vunpack.c.l.b16 %v618
    %v655 = vunpack.c.l.b16 %v619
    %v656 = vunpack.c.l.b16 %v620
    %v657 = vunpack.c.l.b16 %v621
    %v658 = vunpack.c.l.b16 %v622
    %v659 = vunpack.c.l.b16 %v623
    %v660 = vunpack.c.l.b16 %v624
    %v661 = vunpack.c.l.b16 %v625
    %v662 = vunpack.c.l.b16 %v626
    %v663 = vunpack.c.l.b16 %v627
    %v664 = vunpack.c.l.b16 %v628
    %v665 = vunpack.c.l.b16 %v629
    %v666 = vunpack.c.l.b16 %v630
    %v667 = vunpack.c.l.b16 %v631
    %v668 = vunpack.c.l.b16 %v632
    %v669 = vunpack.c.l.b16 %v633
    %v670 = vpack.c.b16 %v655, %v654
    %v671 = vpack.c.b16 %v657, %v656
    %v672 = vpack.c.b16 %v659, %v658
    %v673 = vpack.c.b16 %v661, %v660
    %v674 = vpack.c.b16 %v663, %v662
    %v675 = vpack.c.b16 %v665, %v664
    %v676 = vpack.c.b16 %v667, %v666
    %v677 = vpack.c.b16 %v669, %v668
    %686 = vmatpush.bf16.msra.mxu0 %v677
    %687 = vmatpush.bf16.msra.mxu0 %v676
    %688 = vmatpush.bf16.msra.mxu0 %v675
    %689 = vmatpush.bf16.msra.mxu0 %v674
    %690 = vmatpush.bf16.msra.mxu0 %v673
    %691 = vmatpush.bf16.msra.mxu0 %v672
    %692 = vmatpush.bf16.msra.mxu0 %v671
    %693 = vmatpush.bf16.msra.mxu0 %v670
    %694 = vmatmul.bf16.gmra.mxu0 %v617
    %v695 = vpop.f32.mrf.mxu0
    %v696 = vadd.f32 %v636, %v695
    %v697 = vpop.f32.mrf.mxu0
    %698 = vdwg.mxu0
    %699 = vst [vmem:[#allocation14] sm:$0xff] %v696
    // Predicated region
    $region82: #{tpu_custom_call.1} parent=1 // pred_check
      _
    $region83: #{tpu_custom_call.1} parent=1 // pred_check_branch
      %701 = sbr.rel (0) target = $region85
    $region84: #{tpu_custom_call.1} parent=1 // pred_region
      %703 = vsyncadd [#allocation4], 0
      %s705 = sshll.u32 [#allocation14], 4
      %s706 = int_to_ptr.vmem [resolvable:$true] %s705
      %s707 = sshll.u32 %s13, 4
      %s708 = int_to_ptr.hbm [resolvable:$true] %s707
      %710 = dma.vmem_to_hbm [thread:$0]  %s706, 128, %s708, [#allocation4]
    $region85: #{tpu_custom_call.1} parent=1 // pred_fallthru
      _
    // Predicated region
    $region86: #{tpu_custom_call.1} parent=1 // pred_check
      _
    $region87: #{tpu_custom_call.1} parent=1 // pred_check_branch
      %712 = sbr.rel (0) target = $region89
    $region88: #{tpu_custom_call.1} parent=1 // pred_region
      %714 = dma.done [#allocation4], 128
    $region89: #{tpu_custom_call.1} parent=1 // pred_fallthru
      _
    %715 = vsyncpa [#allocation3], 1
    %716 = vsyncpa [#allocation6], 1
    %717 = vsyncpa [#allocation9], 1
    %718 = vsyncpa [#allocation12], 1
    %719 = vsyncpa [#allocation4], 1

// kernel: tpu_custom_call.1
$region0: #{tpu_custom_call.1}
  #allocation0 [shape = 'u32[]', space=smem, size = 0x4, offset = 0x4, fixed_abs, tag = 'smem constant byte address 0x4 - core index']
  #allocation1 [shape = 'u32[72,128]{1,0:T(1,128)}', space=vmem, size = 0x9000, scoped, tag = 'internal scratch']
  %s0 = inlined_call_operand.hbm [shape: bf16[8,128], index: 0, kind: input, shape index: {}]
  %s1 = inlined_call_operand.hbm [shape: bf16[128,128], index: 1, kind: input, shape index: {}]
  %s2 = inlined_call_operand.vmem [shape: bf16[1,128], index: 2, kind: input, shape index: {}]
  %s3 = inlined_call_operand.hbm [shape: bf16[128,128], index: 3, kind: input, shape index: {}]
  %s4 = inlined_call_operand.vmem [shape: bf16[1,128], index: 4, kind: input, shape index: {}]
  %s5 = inlined_call_operand.hbm [shape: bf16[128,128], index: 5, kind: input, shape index: {}]
  %s6 = inlined_call_operand.vmem [shape: bf16[1,128], index: 6, kind: input, shape index: {}]
  %s7 = inlined_call_operand.hbm [shape: bf16[128,128], index: 7, kind: input, shape index: {}]
  %s8 = inlined_call_operand.vmem [shape: bf16[1,128], index: 8, kind: input, shape index: {}]
  %s9 = inlined_call_operand.hbm [shape: bf16[128,128], index: 9, kind: input, shape index: {}]
  %s10 = inlined_call_operand.vmem [shape: bf16[1,128], index: 10, kind: input, shape index: {}]
  %s11 = inlined_call_operand.hbm [shape: bf16[128,128], index: 11, kind: input, shape index: {}]
  %s12 = inlined_call_operand.vmem [shape: f32[1,128], index: 12, kind: input, shape index: {}]
  %s13 = inlined_call_operand.hbm [shape: f32[8,128], index: 13, kind: output, shape index: {}]
  %s14 = sld [smem:[#allocation0]]
  $region90: #{tpu_custom_call.1} parent=0
    _
  %s16 = ssub.s32 1, %s14
  %s17 = scalar_select 0, %s16, %s14
  $region1: #{tpu_custom_call.1} parent=0
    #allocation2 [shape = 'u8[2048]{0}', space=vmem, size = 0x800, scoped, tag = 'input window, operand 0, single buffered']
    #allocation3 [shape = 's32[1]{0}', space=sflag, size = 0x4, scoped, tag = 'scoped memory for tpu_custom_call.1']
    #allocation4 [shape = 's32[1]{0}', space=sflag, size = 0x4, scoped, tag = 'scoped memory for tpu_custom_call.1']
    #allocation5 [shape = 'u8[32768]{0}', space=vmem, size = 0x8000, scoped, tag = 'input window, operand 1, single buffered']
    #allocation6 [shape = 's32[1]{0}', space=sflag, size = 0x4, scoped, tag = 'scoped memory for tpu_custom_call.1']
    #allocation7 [shape = 'u8[32768]{0}', space=vmem, size = 0x8000, scoped, tag = 'input window, operand 3, single buffered']
    #allocation8 [shape = 'u8[32768]{0}', space=vmem, size = 0x8000, scoped, tag = 'input window, operand 5, single buffered']
    #allocation9 [shape = 's32[1]{0}', space=sflag, size = 0x4, scoped, tag = 'scoped memory for tpu_custom_call.1']
    #allocation10 [shape = 'u8[32768]{0}', space=vmem, size = 0x8000, scoped, tag = 'input window, operand 7, single buffered']
    #allocation11 [shape = 'u8[32768]{0}', space=vmem, size = 0x8000, scoped, tag = 'input window, operand 9, single buffered']
    #allocation12 [shape = 's32[1]{0}', space=sflag, size = 0x4, scoped, tag = 'scoped memory for tpu_custom_call.1']
    #allocation13 [shape = 'u8[32768]{0}', space=vmem, size = 0x8000, scoped, tag = 'input window, operand 11, single buffered']
    #allocation14 [shape = 'u8[4096]{0}', space=vmem, size = 0x1000, scoped, tag = 'output window, operand 0, single buffered']
    %18 = vsyncpa [#allocation3], 0
    %19 = vsyncpa [#allocation6], 0
    %20 = vsyncpa [#allocation9], 0
    %21 = vsyncpa [#allocation12], 0
    %22 = vsyncpa [#allocation4], 0
    // Predicated region
    $region2: #{tpu_custom_call.1} parent=1 // pred_check
      _
    $region3: #{tpu_custom_call.1} parent=1 // pred_check_branch
      %24 = sbr.rel (0) target = $region5
    $region4: #{tpu_custom_call.1} parent=1 // pred_region
      %26 = vsyncadd [#allocation3], 0
      %s28 = sshll.u32 %s0, 4
      %s29 = int_to_ptr.hbm [resolvable:$true] %s28
      %s30 = sshll.u32 [#allocation2], 4
      %s31 = int_to_ptr.vmem [resolvable:$true] %s30
      %33 = dma.hbm_to_vmem [thread:$0]  %s29, 64, %s31, [#allocation3]
    $region5: #{tpu_custom_call.1} parent=1 // pred_fallthru
      _
    // Predicated region
    $region6: #{tpu_custom_call.1} parent=1 // pred_check
      _
    $region7: #{tpu_custom_call.1} parent=1 // pred_check_branch
      %35 = sbr.rel (0) target = $region9
    $region8: #{tpu_custom_call.1} parent=1 // pred_region
      %37 = vsyncadd [#allocation6], 0
      %s38 = sshll.u32 %s1, 4
      %s39 = int_to_ptr.hbm [resolvable:$true] %s38
      %s40 = sshll.u32 [#allocation5], 4
      %s41 = int_to_ptr.vmem [resolvable:$true] %s40
      %46 = dma.hbm_to_vmem [thread:$0]  %s39, 1024, %s41, [#allocation6], 64, 64, 4
    $region9: #{tpu_custom_call.1} parent=1 // pred_fallthru
      _
    // Predicated region
    $region10: #{tpu_custom_call.1} parent=1 // pred_check
      _
    $region11: #{tpu_custom_call.1} parent=1 // pred_check_branch
      %48 = sbr.rel (0) target = $region13
    $region12: #{tpu_custom_call.1} parent=1 // pred_region
      _
    $region13: #{tpu_custom_call.1} parent=1 // pred_fallthru
      _
    // Predicated region
    $region14: #{tpu_custom_call.1} parent=1 // pred_check
      _
    $region15: #{tpu_custom_call.1} parent=1 // pred_check_branch
      %50 = sbr.rel (0) target = $region17
    $region16: #{tpu_custom_call.1} parent=1 // pred_region
      %52 = vsyncadd [#allocation6], 0
      %s53 = sshll.u32 %s3, 4
      %s54 = int_to_ptr.hbm [resolvable:$true] %s53
      %s55 = sshll.u32 [#allocation7], 4
      %s56 = int_to_ptr.vmem [resolvable:$true] %s55
      %61 = dma.hbm_to_vmem [thread:$0]  %s54, 1024, %s56, [#allocation6], 64, 64, 4
    $region17: #{tpu_custom_call.1} parent=1 // pred_fallthru
      _
    // Predicated region
    $region18: #{tpu_custom_call.1} parent=1 // pred_check
      _
    $region19: #{tpu_custom_call.1} parent=1 // pred_check_branch
      %63 = sbr.rel (0) target = $region21
    $region20: #{tpu_custom_call.1} parent=1 // pred_region
      _
    $region21: #{tpu_custom_call.1} parent=1 // pred_fallthru
      _
    // Predicated region
    $region22: #{tpu_custom_call.1} parent=1 // pred_check
      _
    $region23: #{tpu_custom_call.1} parent=1 // pred_check_branch
      %65 = sbr.rel (0) target = $region25
    $region24: #{tpu_custom_call.1} parent=1 // pred_region
      %67 = vsyncadd [#allocation9], 0
      %s68 = sshll.u32 %s5, 4
      %s69 = int_to_ptr.hbm [resolvable:$true] %s68
      %s70 = sshll.u32 [#allocation8], 4
      %s71 = int_to_ptr.vmem [resolvable:$true] %s70
      %76 = dma.hbm_to_vmem [thread:$0]  %s69, 1024, %s71, [#allocation9], 64, 64, 4
    $region25: #{tpu_custom_call.1} parent=1 // pred_fallthru
      _
    // Predicated region
    $region26: #{tpu_custom_call.1} parent=1 // pred_check
      _
    $region27: #{tpu_custom_call.1} parent=1 // pred_check_branch
      %78 = sbr.rel (0) target = $region29
    $region28: #{tpu_custom_call.1} parent=1 // pred_region
      _
    $region29: #{tpu_custom_call.1} parent=1 // pred_fallthru
      _
    // Predicated region
    $region30: #{tpu_custom_call.1} parent=1 // pred_check
      _
    $region31: #{tpu_custom_call.1} parent=1 // pred_check_branch
      %80 = sbr.rel (0) target = $region33
    $region32: #{tpu_custom_call.1} parent=1 // pred_region
      %82 = vsyncadd [#allocation9], 0
      %s83 = sshll.u32 %s7, 4
      %s84 = int_to_ptr.hbm [resolvable:$true] %s83
      %s85 = sshll.u32 [#allocation10], 4
      %s86 = int_to_ptr.vmem [resolvable:$true] %s85
      %91 = dma.hbm_to_vmem [thread:$0]  %s84, 1024, %s86, [#allocation9], 64, 64, 4
    $region33: #{tpu_custom_call.1} parent=1 // pred_fallthru
      _
    // Predicated region
    $region34: #{tpu_custom_call.1} parent=1 // pred_check
      _
    $region35: #{tpu_custom_call.1} parent=1 // pred_check_branch
      %93 = sbr.rel (0) target = $region37
    $region36: #{tpu_custom_call.1} parent=1 // pred_region
      _
    $region37: #{tpu_custom_call.1} parent=1 // pred_fallthru
      _
    // Predicated region
    $region38: #{tpu_custom_call.1} parent=1 // pred_check
      _
    $region39: #{tpu_custom_call.1} parent=1 // pred_check_branch
      %95 = sbr.rel (0) target = $region41
    $region40: #{tpu_custom_call.1} parent=1 // pred_region
      %97 = vsyncadd [#allocation12], 0
      %s98 = sshll.u32 %s9, 4
      %s99 = int_to_ptr.hbm [resolvable:$true] %s98
      %s100 = sshll.u32 [#allocation11], 4
      %s101 = int_to_ptr.vmem [resolvable:$true] %s100
      %106 = dma.hbm_to_vmem [thread:$0]  %s99, 1024, %s101, [#allocation12], 64, 64, 4
    $region41: #{tpu_custom_call.1} parent=1 // pred_fallthru
      _
    // Predicated region
    $region42: #{tpu_custom_call.1} parent=1 // pred_check
      _
    $region43: #{tpu_custom_call.1} parent=1 // pred_check_branch
      %108 = sbr.rel (0) target = $region45
    $region44: #{tpu_custom_call.1} parent=1 // pred_region
      _
    $region45: #{tpu_custom_call.1} parent=1 // pred_fallthru
      _
    // Predicated region
    $region46: #{tpu_custom_call.1} parent=1 // pred_check
      _
    $region47: #{tpu_custom_call.1} parent=1 // pred_check_branch
      %110 = sbr.rel (0) target = $region49
    $region48: #{tpu_custom_call.1} parent=1 // pred_region
      %112 = vsyncadd [#allocation12], 0
      %s113 = sshll.u32 %s11, 4
      %s114 = int_to_ptr.hbm [resolvable:$true] %s113
      %s115 = sshll.u32 [#allocation13], 4
      %s116 = int_to_ptr.vmem [resolvable:$true] %s115
      %121 = dma.hbm_to_vmem [thread:$0]  %s114, 1024, %s116, [#allocation12], 64, 64, 4
    $region49: #{tpu_custom_call.1} parent=1 // pred_fallthru
      _
    // Predicated region
    $region50: #{tpu_custom_call.1} parent=1 // pred_check
      _
    $region51: #{tpu_custom_call.1} parent=1 // pred_check_branch
      %123 = sbr.rel (0) target = $region53
    $region52: #{tpu_custom_call.1} parent=1 // pred_region
      _
    $region53: #{tpu_custom_call.1} parent=1 // pred_fallthru
      _
    // Predicated region
    $region54: #{tpu_custom_call.1} parent=1 // pred_check
      _
    $region55: #{tpu_custom_call.1} parent=1 // pred_check_branch
      %125 = sbr.rel (0) target = $region57
    $region56: #{tpu_custom_call.1} parent=1 // pred_region
      %127 = dma.done [#allocation3], 64
    $region57: #{tpu_custom_call.1} parent=1 // pred_fallthru
      _
    // Predicated region
    $region58: #{tpu_custom_call.1} parent=1 // pred_check
      _
    $region59: #{tpu_custom_call.1} parent=1 // pred_check_branch
      %129 = sbr.rel (0) target = $region61
    $region60: #{tpu_custom_call.1} parent=1 // pred_region
      %131 = dma.done [#allocation6], 1024
    $region61: #{tpu_custom_call.1} parent=1 // pred_fallthru
      _
    // Predicated region
    $region62: #{tpu_custom_call.1} parent=1 // pred_check
      _
    $region63: #{tpu_custom_call.1} parent=1 // pred_check_branch
      %133 = sbr.rel (0) target = $region65
    $region64: #{tpu_custom_call.1} parent=1 // pred_region
      %135 = dma.done [#allocation6], 1024
    $region65: #{tpu_custom_call.1} parent=1 // pred_fallthru
      _
    // Predicated region
    $region66: #{tpu_custom_call.1} parent=1 // pred_check
      _
    $region67: #{tpu_custom_call.1} parent=1 // pred_check_branch
      %137 = sbr.rel (0) target = $region69
    $region68: #{tpu_custom_call.1} parent=1 // pred_region
      %139 = dma.done [#allocation9], 1024
    $region69: #{tpu_custom_call.1} parent=1 // pred_fallthru
      _
    // Predicated region
    $region70: #{tpu_custom_call.1} parent=1 // pred_check
      _
    $region71: #{tpu_custom_call.1} parent=1 // pred_check_branch
      %141 = sbr.rel (0) target = $region73
    $region72: #{tpu_custom_call.1} parent=1 // pred_region
      %143 = dma.done [#allocation9], 1024
    $region73: #{tpu_custom_call.1} parent=1 // pred_fallthru
      _
    // Predicated region
    $region74: #{tpu_custom_call.1} parent=1 // pred_check
      _
    $region75: #{tpu_custom_call.1} parent=1 // pred_check_branch
      %145 = sbr.rel (0) target = $region77
    $region76: #{tpu_custom_call.1} parent=1 // pred_region
      %147 = dma.done [#allocation12], 1024
    $region77: #{tpu_custom_call.1} parent=1 // pred_fallthru
      _
    // Predicated region
    $region78: #{tpu_custom_call.1} parent=1 // pred_check
      _
    $region79: #{tpu_custom_call.1} parent=1 // pred_check_branch
      %149 = sbr.rel (0) target = $region81
    $region80: #{tpu_custom_call.1} parent=1 // pred_region
      %151 = dma.done [#allocation12], 1024
    $region81: #{tpu_custom_call.1} parent=1 // pred_fallthru
      _
    %v152 = vld [vmem:[#allocation2] sm:$0xf]
    %v153 = vld [vmem:[#allocation5] sm:$0xf]
    %v154 = vld [vmem:[#allocation5 + $0x4] sm:$0xf]
    %v155 = vld [vmem:[#allocation5 + $0x8] sm:$0xf]
    %v156 = vld [vmem:[#allocation5 + $0xc] sm:$0xf]
    %v157 = vld [vmem:[#allocation5 + $0x10] sm:$0xf]
    %v158 = vld [vmem:[#allocation5 + $0x14] sm:$0xf]
    %v159 = vld [vmem:[#allocation5 + $0x18] sm:$0xf]
    %v160 = vld [vmem:[#allocation5 + $0x1c] sm:$0xf]
    %v161 = vld [vmem:[#allocation5 + $0x20] sm:$0xf]
    %v162 = vld [vmem:[#allocation5 + $0x24] sm:$0xf]
    %v163 = vld [vmem:[#allocation5 + $0x28] sm:$0xf]
    %v164 = vld [vmem:[#allocation5 + $0x2c] sm:$0xf]
    %v165 = vld [vmem:[#allocation5 + $0x30] sm:$0xf]
    %v166 = vld [vmem:[#allocation5 + $0x34] sm:$0xf]
    %v167 = vld [vmem:[#allocation5 + $0x38] sm:$0xf]
    %v168 = vld [vmem:[#allocation5 + $0x3c] sm:$0xf]
    %v185 = vunpack.c.l.b16 %v153
    %v186 = vunpack.c.l.b16 %v154
    %v187 = vunpack.c.l.b16 %v155
    %v188 = vunpack.c.l.b16 %v156
    %v189 = vunpack.c.l.b16 %v157
    %v190 = vunpack.c.l.b16 %v158
    %v191 = vunpack.c.l.b16 %v159
    %v192 = vunpack.c.l.b16 %v160
    %v193 = vunpack.c.l.b16 %v161
    %v194 = vunpack.c.l.b16 %v162
    %v195 = vunpack.c.l.b16 %v163
    %v196 = vunpack.c.l.b16 %v164
    %v197 = vunpack.c.l.b16 %v165
    %v198 = vunpack.c.l.b16 %v166
    %v199 = vunpack.c.l.b16 %v167
    %v200 = vunpack.c.l.b16 %v168
    %v201 = vpack.c.b16 %v186, %v185
    %v202 = vpack.c.b16 %v188, %v187
    %v203 = vpack.c.b16 %v190, %v189
    %v204 = vpack.c.b16 %v192, %v191
    %v205 = vpack.c.b16 %v194, %v193
    %v206 = vpack.c.b16 %v196, %v195
    %v207 = vpack.c.b16 %v198, %v197
    %v208 = vpack.c.b16 %v200, %v199
    %217 = vmatpush.bf16.msra.mxu0 %v208
    %218 = vmatpush.bf16.msra.mxu0 %v207
    %219 = vmatpush.bf16.msra.mxu0 %v206
    %220 = vmatpush.bf16.msra.mxu0 %v205
    %221 = vmatpush.bf16.msra.mxu0 %v204
    %222 = vmatpush.bf16.msra.mxu0 %v203
    %223 = vmatpush.bf16.msra.mxu0 %v202
    %224 = vmatpush.bf16.msra.mxu0 %v201
    %225 = vmatmul.bf16.gmra.mxu0 %v152
    %v226 = vpop.f32.mrf.mxu0
    %v227 = vadd.f32 0.0, %v226
    %v228 = vpop.f32.mrf.mxu0
    %229 = vdwg.mxu0
    %v230 = vpack.c.bf16 %v227, %v227
    %v231 = vld [vmem:[%s2] sm:$0x1]
    %v233 = vpack.i.b16 %v231, %v231
    %v235 = vperm.slane %v233, 0
    %v236 = vunpack.c.l.bf16 %v230
    %v237 = vunpack.c.l.bf16 %v235
    %v238 = vadd.f32 %v236, %v237
    %v239 = vpack.c.bf16 %v238, %v238
    %v240 = vunpack.c.l.bf16 %v239
    %v241 = vmul.f32 %v240, 0.20019531
    %v242 = vpack.c.bf16 %v241, %v241
    %v243 = vunpack.c.l.bf16 %v242
    %v244 = vmax.f32 %v240, %v243
    %v245 = vpack.c.bf16 %v244, %v244
    %v246 = vld [vmem:[#allocation7] sm:$0xf]
    %v247 = vld [vmem:[#allocation7 + $0x4] sm:$0xf]
    %v248 = vld [vmem:[#allocation7 + $0x8] sm:$0xf]
    %v249 = vld [vmem:[#allocation7 + $0xc] sm:$0xf]
    %v250 = vld [vmem:[#allocation7 + $0x10] sm:$0xf]
    %v251 = vld [vmem:[#allocation7 + $0x14] sm:$0xf]
    %v252 = vld [vmem:[#allocation7 + $0x18] sm:$0xf]
    %v253 = vld [vmem:[#allocation7 + $0x1c] sm:$0xf]
    %v254 = vld [vmem:[#allocation7 + $0x20] sm:$0xf]
    %v255 = vld [vmem:[#allocation7 + $0x24] sm:$0xf]
    %v256 = vld [vmem:[#allocation7 + $0x28] sm:$0xf]
    %v257 = vld [vmem:[#allocation7 + $0x2c] sm:$0xf]
    %v258 = vld [vmem:[#allocation7 + $0x30] sm:$0xf]
    %v259 = vld [vmem:[#allocation7 + $0x34] sm:$0xf]
    %v260 = vld [vmem:[#allocation7 + $0x38] sm:$0xf]
    %v261 = vld [vmem:[#allocation7 + $0x3c] sm:$0xf]
    %v278 = vunpack.c.l.b16 %v246
    %v279 = vunpack.c.l.b16 %v247
    %v280 = vunpack.c.l.b16 %v248
    %v281 = vunpack.c.l.b16 %v249
    %v282 = vunpack.c.l.b16 %v250
    %v283 = vunpack.c.l.b16 %v251
    %v284 = vunpack.c.l.b16 %v252
    %v285 = vunpack.c.l.b16 %v253
    %v286 = vunpack.c.l.b16 %v254
    %v287 = vunpack.c.l.b16 %v255
    %v288 = vunpack.c.l.b16 %v256
    %v289 = vunpack.c.l.b16 %v257
    %v290 = vunpack.c.l.b16 %v258
    %v291 = vunpack.c.l.b16 %v259
    %v292 = vunpack.c.l.b16 %v260
    %v293 = vunpack.c.l.b16 %v261
    %v294 = vpack.c.b16 %v279, %v278
    %v295 = vpack.c.b16 %v281, %v280
    %v296 = vpack.c.b16 %v283, %v282
    %v297 = vpack.c.b16 %v285, %v284
    %v298 = vpack.c.b16 %v287, %v286
    %v299 = vpack.c.b16 %v289, %v288
    %v300 = vpack.c.b16 %v291, %v290
    %v301 = vpack.c.b16 %v293, %v292
    %310 = vmatpush.bf16.msra.mxu0 %v301
    %311 = vmatpush.bf16.msra.mxu0 %v300
    %312 = vmatpush.bf16.msra.mxu0 %v299
    %313 = vmatpush.bf16.msra.mxu0 %v298
    %314 = vmatpush.bf16.msra.mxu0 %v297
    %315 = vmatpush.bf16.msra.mxu0 %v296
    %316 = vmatpush.bf16.msra.mxu0 %v295
    %317 = vmatpush.bf16.msra.mxu0 %v294
    %318 = vmatmul.bf16.gmra.mxu0 %v245
    %v319 = vpop.f32.mrf.mxu0
    %v320 = vadd.f32 0.0, %v319
    %v321 = vpop.f32.mrf.mxu0
    %322 = vdwg.mxu0
    %v323 = vpack.c.bf16 %v320, %v320
    %v324 = vld [vmem:[%s4] sm:$0x1]
    %v326 = vpack.i.b16 %v324, %v324
    %v328 = vperm.slane %v326, 0
    %v329 = vunpack.c.l.bf16 %v323
    %v330 = vunpack.c.l.bf16 %v328
    %v331 = vadd.f32 %v329, %v330
    %v332 = vpack.c.bf16 %v331, %v331
    %v333 = vunpack.c.l.bf16 %v332
    %v334 = vmul.f32 %v333, 0.20019531
    %v335 = vpack.c.bf16 %v334, %v334
    %v336 = vunpack.c.l.bf16 %v335
    %v337 = vmax.f32 %v333, %v336
    %v338 = vpack.c.bf16 %v337, %v337
    %v339 = vld [vmem:[#allocation8] sm:$0xf]
    %v340 = vld [vmem:[#allocation8 + $0x4] sm:$0xf]
    %v341 = vld [vmem:[#allocation8 + $0x8] sm:$0xf]
    %v342 = vld [vmem:[#allocation8 + $0xc] sm:$0xf]
    %v343 = vld [vmem:[#allocation8 + $0x10] sm:$0xf]
    %v344 = vld [vmem:[#allocation8 + $0x14] sm:$0xf]
    %v345 = vld [vmem:[#allocation8 + $0x18] sm:$0xf]
    %v346 = vld [vmem:[#allocation8 + $0x1c] sm:$0xf]
    %v347 = vld [vmem:[#allocation8 + $0x20] sm:$0xf]
    %v348 = vld [vmem:[#allocation8 + $0x24] sm:$0xf]
    %v349 = vld [vmem:[#allocation8 + $0x28] sm:$0xf]
    %v350 = vld [vmem:[#allocation8 + $0x2c] sm:$0xf]
    %v351 = vld [vmem:[#allocation8 + $0x30] sm:$0xf]
    %v352 = vld [vmem:[#allocation8 + $0x34] sm:$0xf]
    %v353 = vld [vmem:[#allocation8 + $0x38] sm:$0xf]
    %v354 = vld [vmem:[#allocation8 + $0x3c] sm:$0xf]
    %v371 = vunpack.c.l.b16 %v339
    %v372 = vunpack.c.l.b16 %v340
    %v373 = vunpack.c.l.b16 %v341
    %v374 = vunpack.c.l.b16 %v342
    %v375 = vunpack.c.l.b16 %v343
    %v376 = vunpack.c.l.b16 %v344
    %v377 = vunpack.c.l.b16 %v345
    %v378 = vunpack.c.l.b16 %v346
    %v379 = vunpack.c.l.b16 %v347
    %v380 = vunpack.c.l.b16 %v348
    %v381 = vunpack.c.l.b16 %v349
    %v382 = vunpack.c.l.b16 %v350
    %v383 = vunpack.c.l.b16 %v351
    %v384 = vunpack.c.l.b16 %v352
    %v385 = vunpack.c.l.b16 %v353
    %v386 = vunpack.c.l.b16 %v354
    %v387 = vpack.c.b16 %v372, %v371
    %v388 = vpack.c.b16 %v374, %v373
    %v389 = vpack.c.b16 %v376, %v375
    %v390 = vpack.c.b16 %v378, %v377
    %v391 = vpack.c.b16 %v380, %v379
    %v392 = vpack.c.b16 %v382, %v381
    %v393 = vpack.c.b16 %v384, %v383
    %v394 = vpack.c.b16 %v386, %v385
    %403 = vmatpush.bf16.msra.mxu0 %v394
    %404 = vmatpush.bf16.msra.mxu0 %v393
    %405 = vmatpush.bf16.msra.mxu0 %v392
    %406 = vmatpush.bf16.msra.mxu0 %v391
    %407 = vmatpush.bf16.msra.mxu0 %v390
    %408 = vmatpush.bf16.msra.mxu0 %v389
    %409 = vmatpush.bf16.msra.mxu0 %v388
    %410 = vmatpush.bf16.msra.mxu0 %v387
    %411 = vmatmul.bf16.gmra.mxu0 %v338
    %v412 = vpop.f32.mrf.mxu0
    %v413 = vadd.f32 0.0, %v412
    %v414 = vpop.f32.mrf.mxu0
    %415 = vdwg.mxu0
    %v416 = vpack.c.bf16 %v413, %v413
    %v417 = vld [vmem:[%s6] sm:$0x1]
    %v419 = vpack.i.b16 %v417, %v417
    %v421 = vperm.slane %v419, 0
    %v422 = vunpack.c.l.bf16 %v416
    %v423 = vunpack.c.l.bf16 %v421
    %v424 = vadd.f32 %v422, %v423
    %v425 = vpack.c.bf16 %v424, %v424
    %v426 = vunpack.c.l.bf16 %v425
    %v427 = vmul.f32 %v426, 0.20019531
    %v428 = vpack.c.bf16 %v427, %v427
    %v429 = vunpack.c.l.bf16 %v428
    %v430 = vmax.f32 %v426, %v429
    %v431 = vpack.c.bf16 %v430, %v430
    %v432 = vld [vmem:[#allocation10] sm:$0xf]
    %v433 = vld [vmem:[#allocation10 + $0x4] sm:$0xf]
    %v434 = vld [vmem:[#allocation10 + $0x8] sm:$0xf]
    %v435 = vld [vmem:[#allocation10 + $0xc] sm:$0xf]
    %v436 = vld [vmem:[#allocation10 + $0x10] sm:$0xf]
    %v437 = vld [vmem:[#allocation10 + $0x14] sm:$0xf]
    %v438 = vld [vmem:[#allocation10 + $0x18] sm:$0xf]
    %v439 = vld [vmem:[#allocation10 + $0x1c] sm:$0xf]
    %v440 = vld [vmem:[#allocation10 + $0x20] sm:$0xf]
    %v441 = vld [vmem:[#allocation10 + $0x24] sm:$0xf]
    %v442 = vld [vmem:[#allocation10 + $0x28] sm:$0xf]
    %v443 = vld [vmem:[#allocation10 + $0x2c] sm:$0xf]
    %v444 = vld [vmem:[#allocation10 + $0x30] sm:$0xf]
    %v445 = vld [vmem:[#allocation10 + $0x34] sm:$0xf]
    %v446 = vld [vmem:[#allocation10 + $0x38] sm:$0xf]
    %v447 = vld [vmem:[#allocation10 + $0x3c] sm:$0xf]
    %v464 = vunpack.c.l.b16 %v432
    %v465 = vunpack.c.l.b16 %v433
    %v466 = vunpack.c.l.b16 %v434
    %v467 = vunpack.c.l.b16 %v435
    %v468 = vunpack.c.l.b16 %v436
    %v469 = vunpack.c.l.b16 %v437
    %v470 = vunpack.c.l.b16 %v438
    %v471 = vunpack.c.l.b16 %v439
    %v472 = vunpack.c.l.b16 %v440
    %v473 = vunpack.c.l.b16 %v441
    %v474 = vunpack.c.l.b16 %v442
    %v475 = vunpack.c.l.b16 %v443
    %v476 = vunpack.c.l.b16 %v444
    %v477 = vunpack.c.l.b16 %v445
    %v478 = vunpack.c.l.b16 %v446
    %v479 = vunpack.c.l.b16 %v447
    %v480 = vpack.c.b16 %v465, %v464
    %v481 = vpack.c.b16 %v467, %v466
    %v482 = vpack.c.b16 %v469, %v468
    %v483 = vpack.c.b16 %v471, %v470
    %v484 = vpack.c.b16 %v473, %v472
    %v485 = vpack.c.b16 %v475, %v474
    %v486 = vpack.c.b16 %v477, %v476
    %v487 = vpack.c.b16 %v479, %v478
    %496 = vmatpush.bf16.msra.mxu0 %v487
    %497 = vmatpush.bf16.msra.mxu0 %v486
    %498 = vmatpush.bf16.msra.mxu0 %v485
    %499 = vmatpush.bf16.msra.mxu0 %v484
    %500 = vmatpush.bf16.msra.mxu0 %v483
    %501 = vmatpush.bf16.msra.mxu0 %v482
    %502 = vmatpush.bf16.msra.mxu0 %v481
    %503 = vmatpush.bf16.msra.mxu0 %v480
    %504 = vmatmul.bf16.gmra.mxu0 %v431
    %v505 = vpop.f32.mrf.mxu0
    %v506 = vadd.f32 0.0, %v505
    %v507 = vpop.f32.mrf.mxu0
    %508 = vdwg.mxu0
    %v509 = vpack.c.bf16 %v506, %v506
    %v510 = vld [vmem:[%s8] sm:$0x1]
    %v512 = vpack.i.b16 %v510, %v510
    %v514 = vperm.slane %v512, 0
    %v515 = vunpack.c.l.bf16 %v509
    %v516 = vunpack.c.l.bf16 %v514
    %v517 = vadd.f32 %v515, %v516
    %v518 = vpack.c.bf16 %v517, %v517
    %v519 = vunpack.c.l.bf16 %v518
    %v520 = vmul.f32 %v519, 0.20019531
    %v521 = vpack.c.bf16 %v520, %v520
    %v522 = vunpack.c.l.bf16 %v521
    %v523 = vmax.f32 %v519, %v522
    %v524 = vpack.c.bf16 %v523, %v523
    %v525 = vld [vmem:[#allocation11] sm:$0xf]
    %v526 = vld [vmem:[#allocation11 + $0x4] sm:$0xf]
    %v527 = vld [vmem:[#allocation11 + $0x8] sm:$0xf]
    %v528 = vld [vmem:[#allocation11 + $0xc] sm:$0xf]
    %v529 = vld [vmem:[#allocation11 + $0x10] sm:$0xf]
    %v530 = vld [vmem:[#allocation11 + $0x14] sm:$0xf]
    %v531 = vld [vmem:[#allocation11 + $0x18] sm:$0xf]
    %v532 = vld [vmem:[#allocation11 + $0x1c] sm:$0xf]
    %v533 = vld [vmem:[#allocation11 + $0x20] sm:$0xf]
    %v534 = vld [vmem:[#allocation11 + $0x24] sm:$0xf]
    %v535 = vld [vmem:[#allocation11 + $0x28] sm:$0xf]
    %v536 = vld [vmem:[#allocation11 + $0x2c] sm:$0xf]
    %v537 = vld [vmem:[#allocation11 + $0x30] sm:$0xf]
    %v538 = vld [vmem:[#allocation11 + $0x34] sm:$0xf]
    %v539 = vld [vmem:[#allocation11 + $0x38] sm:$0xf]
    %v540 = vld [vmem:[#allocation11 + $0x3c] sm:$0xf]
    %v557 = vunpack.c.l.b16 %v525
    %v558 = vunpack.c.l.b16 %v526
    %v559 = vunpack.c.l.b16 %v527
    %v560 = vunpack.c.l.b16 %v528
    %v561 = vunpack.c.l.b16 %v529
    %v562 = vunpack.c.l.b16 %v530
    %v563 = vunpack.c.l.b16 %v531
    %v564 = vunpack.c.l.b16 %v532
    %v565 = vunpack.c.l.b16 %v533
    %v566 = vunpack.c.l.b16 %v534
    %v567 = vunpack.c.l.b16 %v535
    %v568 = vunpack.c.l.b16 %v536
    %v569 = vunpack.c.l.b16 %v537
    %v570 = vunpack.c.l.b16 %v538
    %v571 = vunpack.c.l.b16 %v539
    %v572 = vunpack.c.l.b16 %v540
    %v573 = vpack.c.b16 %v558, %v557
    %v574 = vpack.c.b16 %v560, %v559
    %v575 = vpack.c.b16 %v562, %v561
    %v576 = vpack.c.b16 %v564, %v563
    %v577 = vpack.c.b16 %v566, %v565
    %v578 = vpack.c.b16 %v568, %v567
    %v579 = vpack.c.b16 %v570, %v569
    %v580 = vpack.c.b16 %v572, %v571
    %589 = vmatpush.bf16.msra.mxu0 %v580
    %590 = vmatpush.bf16.msra.mxu0 %v579
    %591 = vmatpush.bf16.msra.mxu0 %v578
    %592 = vmatpush.bf16.msra.mxu0 %v577
    %593 = vmatpush.bf16.msra.mxu0 %v576
    %594 = vmatpush.bf16.msra.mxu0 %v575
    %595 = vmatpush.bf16.msra.mxu0 %v574
    %596 = vmatpush.bf16.msra.mxu0 %v573
    %597 = vmatmul.bf16.gmra.mxu0 %v524
    %v598 = vpop.f32.mrf.mxu0
    %v599 = vadd.f32 0.0, %v598
    %v600 = vpop.f32.mrf.mxu0
    %601 = vdwg.mxu0
    %v602 = vpack.c.bf16 %v599, %v599
    %v603 = vld [vmem:[%s10] sm:$0x1]
    %v605 = vpack.i.b16 %v603, %v603
    %v607 = vperm.slane %v605, 0
    %v608 = vunpack.c.l.bf16 %v602
    %v609 = vunpack.c.l.bf16 %v607
    %v610 = vadd.f32 %v608, %v609
    %v611 = vpack.c.bf16 %v610, %v610
    %v612 = vunpack.c.l.bf16 %v611
    %v613 = vmul.f32 %v612, 0.20019531
    %v614 = vpack.c.bf16 %v613, %v613
    %v615 = vunpack.c.l.bf16 %v614
    %v616 = vmax.f32 %v612, %v615
    %v617 = vpack.c.bf16 %v616, %v616
    %v618 = vld [vmem:[#allocation13] sm:$0xf]
    %v619 = vld [vmem:[#allocation13 + $0x4] sm:$0xf]
    %v620 = vld [vmem:[#allocation13 + $0x8] sm:$0xf]
    %v621 = vld [vmem:[#allocation13 + $0xc] sm:$0xf]
    %v622 = vld [vmem:[#allocation13 + $0x10] sm:$0xf]
    %v623 = vld [vmem:[#allocation13 + $0x14] sm:$0xf]
    %v624 = vld [vmem:[#allocation13 + $0x18] sm:$0xf]
    %v625 = vld [vmem:[#allocation13 + $0x1c] sm:$0xf]
    %v626 = vld [vmem:[#allocation13 + $0x20] sm:$0xf]
    %v627 = vld [vmem:[#allocation13 + $0x24] sm:$0xf]
    %v628 = vld [vmem:[#allocation13 + $0x28] sm:$0xf]
    %v629 = vld [vmem:[#allocation13 + $0x2c] sm:$0xf]
    %v630 = vld [vmem:[#allocation13 + $0x30] sm:$0xf]
    %v631 = vld [vmem:[#allocation13 + $0x34] sm:$0xf]
    %v632 = vld [vmem:[#allocation13 + $0x38] sm:$0xf]
    %v633 = vld [vmem:[#allocation13 + $0x3c] sm:$0xf]
    %v634 = vld [vmem:[%s12] sm:$0x1]
    %v636 = vperm.slane %v634, 0
    %v654 = vunpack.c.l.b16 %v618
    %v655 = vunpack.c.l.b16 %v619
    %v656 = vunpack.c.l.b16 %v620
    %v657 = vunpack.c.l.b16 %v621
    %v658 = vunpack.c.l.b16 %v622
    %v659 = vunpack.c.l.b16 %v623
    %v660 = vunpack.c.l.b16 %v624
    %v661 = vunpack.c.l.b16 %v625
    %v662 = vunpack.c.l.b16 %v626
    %v663 = vunpack.c.l.b16 %v627
    %v664 = vunpack.c.l.b16 %v628
    %v665 = vunpack.c.l.b16 %v629
    %v666 = vunpack.c.l.b16 %v630
    %v667 = vunpack.c.l.b16 %v631
    %v668 = vunpack.c.l.b16 %v632
    %v669 = vunpack.c.l.b16 %v633
    %v670 = vpack.c.b16 %v655, %v654
    %v671 = vpack.c.b16 %v657, %v656
    %v672 = vpack.c.b16 %v659, %v658
    %v673 = vpack.c.b16 %v661, %v660
    %v674 = vpack.c.b16 %v663, %v662
    %v675 = vpack.c.b16 %v665, %v664
    %v676 = vpack.c.b16 %v667, %v666
    %v677 = vpack.c.b16 %v669, %v668
    %686 = vmatpush.bf16.msra.mxu0 %v677
    %687 = vmatpush.bf16.msra.mxu0 %v676
    %688 = vmatpush.bf16.msra.mxu0 %v675
    %689 = vmatpush.bf16.msra.mxu0 %v674
    %690 = vmatpush.bf16.msra.mxu0 %v673
    %691 = vmatpush.bf16.msra.mxu0 %v672
    %692 = vmatpush.bf16.msra.mxu0 %v671
    %693 = vmatpush.bf16.msra.mxu0 %v670
    %694 = vmatmul.bf16.gmra.mxu0 %v617
    %v695 = vpop.f32.mrf.mxu0
    %v696 = vadd.f32 %v636, %v695
    %v697 = vpop.f32.mrf.mxu0
    %698 = vdwg.mxu0
    %699 = vst [vmem:[#allocation14] sm:$0xff] %v696
    // Predicated region
    $region82: #{tpu_custom_call.1} parent=1 // pred_check
      _
    $region83: #{tpu_custom_call.1} parent=1 // pred_check_branch
      %701 = sbr.rel (0) target = $region85
    $region84: #{tpu_custom_call.1} parent=1 // pred_region
      %703 = vsyncadd [#allocation4], 0
      %s705 = sshll.u32 [#allocation14], 4
      %s706 = int_to_ptr.vmem [resolvable:$true] %s705
      %s707 = sshll.u32 %s13, 4
      %s708 = int_to_ptr.hbm [resolvable:$true] %s707
      %710 = dma.vmem_to_hbm [thread:$0]  %s706, 128, %s708, [#allocation4]
    $region85: #{tpu_custom_call.1} parent=1 // pred_fallthru
      _
    // Predicated region
    $region86: #{tpu_custom_call.1} parent=1 // pred_check
      _
    $region87: #{tpu_custom_call.1} parent=1 // pred_check_branch
      %712 = sbr.rel (0) target = $region89
    $region88: #{tpu_custom_call.1} parent=1 // pred_region
      %714 = dma.done [#allocation4], 128
    $region89: #{tpu_custom_call.1} parent=1 // pred_fallthru
      _
    %715 = vsyncpa [#allocation3], 1
    %716 = vsyncpa [#allocation6], 1
    %717 = vsyncpa [#allocation9], 1
    %718 = vsyncpa [#allocation12], 1
    %719 = vsyncpa [#allocation4], 1

</llo_original>
